<compile_context>
chip_gen: v6e
topology: v6e:2x2x1
jax: 0.10.0
libtpu: 0.0.40
codegen_flags: <defaults>
</compile_context>

<pallas_src>
import numpy as np
import jax
import jax.numpy as jnp
from jax import lax
from jax.experimental import pallas as pl
from jax.experimental.pallas import tpu as pltpu

# ---- small config consistent with the module ----
V = 50    # vocab size
E = 32    # opt.embed_dim
H = 32    # opt.hidden_dim  (== embed_dim: attention query is the aspect embedding)
P = 3     # opt.polarities_dim
B = 2     # batch
L = 8     # text sequence length
LA = 4    # aspect sequence length


def aelstm_kernel(asp_x_ref, mask_ref, q_ref,
                  w_ih_ref, w_hh_ref, b_ref,
                  wk_ref, bk_ref, attwk_ref, wsq_ref, bsq_ref, onehot_ref,
                  wd_ref, bd_ref,
                  out_ref, xg_ref):
    # asp_x_ref: (L*B, 2E) time-major flattened    mask_ref: (L*B, 1)   q_ref: (B, E)
    # onehot_ref: (B, L*B) constant, onehot[b, r] = 1 iff r % B == b
    # xg_ref (scratch): (L*B, 4H)                  out_ref: (B, P)
    f32 = jnp.float32

    # ---- hoisted input projection: one (L*B,2E)x(2E,4H) matmul, parked in VMEM
    # so the per-step gate reads are plain offset vlds, not sublane extractions.
    xg_ref[...] = (jnp.dot(asp_x_ref[...], w_ih_ref[...],
                           preferred_element_type=f32)
                   + b_ref[...])                                   # (L*B, 4H)

    w_hh = w_hh_ref[...]                                           # (H, 4H)

    # lane mask selecting the 'g' gate segment (lanes 2H:3H); hoisted out of loop
    lane = lax.broadcasted_iota(jnp.int32, (B, 4 * H), 1)
    g_lane = jnp.logical_and(lane >= 2 * H, lane < 3 * H)

    # ---- LSTM recurrence, fully unrolled (PyTorch gate order i, f, g, o) ----
    h = jnp.zeros((B, H), f32)
    c = jnp.zeros((B, H), f32)
    hs = []
    for t in range(L):
        gates = xg_ref[t * B:(t + 1) * B, :] + jnp.dot(
            h, w_hh, preferred_element_type=f32)                   # (B, 4H)
        # two full-width EUP pushes instead of 4 partial sigmoids + 1 partial tanh
        sig = 0.5 * (jnp.tanh(0.5 * gates) + 1.0)                  # sigmoid of every lane
        act = jnp.where(g_lane, jnp.tanh(gates), sig)              # i,f,o: sigmoid; g: tanh
        i = act[:, 0 * H:1 * H]
        f = act[:, 1 * H:2 * H]
        g = act[:, 2 * H:3 * H]
        o = act[:, 3 * H:4 * H]
        c = f * c + i * g
        h = o * jnp.tanh(c)
        hs.append(h)                                               # stays in vregs

    # ---- stack once, mask once (mask never feeds the recurrence -> same math) ----
    mem = jnp.concatenate(hs, axis=0) * mask_ref[...]              # (L*B, H) time-major

    # ---- Attention (score_function='mlp'), n_head=1, flat time-major ----
    kx = (jnp.dot(mem, wk_ref[...], preferred_element_type=f32)
          + bk_ref[...])                                           # (L*B, H)

    # score = tanh(kx . attw_k + qx . attw_q)  (column matmuls -> mul + lane reduce)
    s_k = jnp.sum(kx * attwk_ref[...], axis=-1, keepdims=True)     # (L*B, 1)
    s_q = (jnp.sum(q_ref[...] * wsq_ref[...], axis=-1, keepdims=True)
           + bsq_ref[...])                                         # (B, 1)
    score = jnp.tanh(s_k + jnp.concatenate([s_q] * L, axis=0))     # (L*B, 1)

    # softmax over time per batch row: |score| <= 1, so exp needs no max shift
    # (mathematically identical softmax). The constant one-hot matrix does the
    # per-batch segment sums (numerator and denominator) on the MXU.
    e = jnp.exp(score)                                             # (L*B, 1)
    num = jnp.dot(onehot_ref[...], e * kx,
                  preferred_element_type=f32)                      # (B, H)
    den = jnp.dot(onehot_ref[...], e,
                  preferred_element_type=f32)                      # (B, 1)
    out_att = num * pl.reciprocal(den, approx=False)               # (B, H)

    # ---- fused projection + classifier: out_att @ (wp@wd) + (bp@wd + bd) ----
    out_ref[...] = (jnp.dot(out_att, wd_ref[...],
                            preferred_element_type=f32)
                    + bd_ref[...])


def init_params(key):
    ks = jax.random.split(key, 12)
    s = 0.1
    emb = jax.random.normal(ks[0], (V, E), jnp.float32) * s
    emb = emb.at[0].set(0.0)  # padding row
    params = dict(
        w_ih=jax.random.normal(ks[1], (2 * E, 4 * H), jnp.float32) * s,
        w_hh=jax.random.normal(ks[2], (H, 4 * H), jnp.float32) * s,
        b=jax.random.normal(ks[3], (1, 4 * H), jnp.float32) * s,     # b_ih + b_hh combined
        wk=jax.random.normal(ks[4], (H, H), jnp.float32) * s,
        bk=jax.random.normal(ks[5], (1, H), jnp.float32) * s,
        wq=jax.random.normal(ks[6], (H, H), jnp.float32) * s,        # embed_dim == hidden_dim
        bq=jax.random.normal(ks[7], (1, H), jnp.float32) * s,
        attw=jax.random.normal(ks[8], (2 * H, 1), jnp.float32) * s,  # Attention.weight (2H,)
        wp=jax.random.normal(ks[9], (H, H), jnp.float32) * s,
        bp=jnp.zeros((1, H), jnp.float32),
        wd=jax.random.normal(ks[10], (H, P), jnp.float32) * s,
        bd=jax.random.normal(ks[11], (1, P), jnp.float32) * s,
    )
    return emb, params


def aelstm_forward(text_idx, aspect_idx, emb, params):
    # ---- glue: embeddings, aspect mean, concat, length mask ----
    x_len = jnp.sum(text_idx != 0, axis=-1)                         # (B,)
    a_len = jnp.sum(aspect_idx != 0, axis=-1).astype(jnp.float32)   # (B,)
    x = emb[text_idx]                                               # (B, L, E)
    a = emb[aspect_idx]                                             # (B, LA, E)
    asp = jnp.sum(a, axis=1) / a_len[:, None]                       # (B, E)
    asp_x = jnp.concatenate(
        [x, jnp.broadcast_to(asp[:, None, :], (B, L, E))], axis=-1)  # (B, L, 2E)
    asp_x_flat = jnp.transpose(asp_x, (1, 0, 2)).reshape(
        L * B, 2 * E).astype(jnp.float32)                            # (L*B, 2E), time-major

    # matches pad_packed_sequence output under the assumption max(x_len) == L
    mask = (jnp.arange(L)[None, :] < x_len[:, None]).astype(jnp.float32)  # (B, L)
    mask_flat = jnp.transpose(mask).reshape(L * B, 1)                # row index = t*B + b

    # constant segment-sum matrix: onehot[b, r] = 1 iff r % B == b
    onehot = (jnp.arange(L * B)[None, :] % B
              == jnp.arange(B)[:, None]).astype(jnp.float32)         # (B, L*B)

    # ---- weight folding (same math, no column matmuls in the kernel tail) ----
    attw = params['attw']                                            # (2H, 1)
    attw_k = attw[:H].reshape(1, H)                                  # key half as a row
    wsq = (params['wq'] @ attw[H:]).reshape(1, E)                    # q @ wsq == (q@wq) @ attw_q
    bsq = (params['bq'] @ attw[H:]).reshape(1, 1)
    wd_fused = params['wp'] @ params['wd']                           # (H, P)
    bd_fused = params['bp'] @ params['wd'] + params['bd']            # (1, P)

    args = (asp_x_flat, mask_flat, asp.astype(jnp.float32),
            params['w_ih'], params['w_hh'], params['b'],
            params['wk'], params['bk'], attw_k, wsq, bsq, onehot,
            wd_fused, bd_fused)

    vmem = pl.BlockSpec(memory_space=pltpu.MemorySpace.VMEM)
    return pl.pallas_call(
        aelstm_kernel,
        out_shape=jax.ShapeDtypeStruct((B, P), jnp.float32),
        in_specs=[vmem] * len(args),
        out_specs=vmem,
        scratch_shapes=[pltpu.VMEM((L * B, 4 * H), jnp.float32)],
        cost_estimate=pl.CostEstimate(flops=430_000, transcendentals=3_000,
                                      bytes_accessed=60_000),
    )(*args)


def aelstm_reference(text_idx, aspect_idx, emb, params):
    """Pure-JAX reference mirroring the PyTorch forward (unfused weights)."""
    x_len = jnp.sum(text_idx != 0, axis=-1)
    a_len = jnp.sum(aspect_idx != 0, axis=-1).astype(jnp.float32)
    x = emb[text_idx]
    a = emb[aspect_idx]
    asp = jnp.sum(a, axis=1) / a_len[:, None]
    asp_x = jnp.concatenate([x, jnp.broadcast_to(asp[:, None, :], (B, L, E))], -1)

    def step(carry, x_t):
        h, c = carry
        g = x_t @ params['w_ih'] + h @ params['w_hh'] + params['b']
        i = jax.nn.sigmoid(g[:, :H]); f = jax.nn.sigmoid(g[:, H:2 * H])
        gg = jnp.tanh(g[:, 2 * H:3 * H]); o = jax.nn.sigmoid(g[:, 3 * H:])
        c = f * c + i * gg
        h = o * jnp.tanh(c)
        return (h, c), h

    (_, _), hs = lax.scan(step, (jnp.zeros((B, H)), jnp.zeros((B, H))),
                          jnp.transpose(asp_x, (1, 0, 2)))
    hs = jnp.transpose(hs, (1, 0, 2))                                # (B, L, H)
    mask = (jnp.arange(L)[None, :] < x_len[:, None]).astype(jnp.float32)
    mem = hs * mask[:, :, None]
    kx = mem @ params['wk'] + params['bk']
    qx = asp @ params['wq'] + params['bq']
    s = jnp.tanh((kx @ params['attw'][:H]).squeeze(-1)
                 + (qx @ params['attw'][H:]))
    attn = jax.nn.softmax(s, axis=-1)
    out_att = jnp.einsum('bl,blh->bh', attn, kx)
    out_proj = out_att @ params['wp'] + params['bp']
    return out_proj @ params['wd'] + params['bd']


if __name__ == "__main__":
    key = jax.random.PRNGKey(0)
    k_text, k_asp, k_par = jax.random.split(key, 3)

    # deterministic token indices with trailing zero padding
    text_raw_indices = jax.random.randint(k_text, (B, L), 1, V, dtype=jnp.int32)
    text_raw_indices = text_raw_indices.at[1, 5:].set(0)   # batch 0 full length -> max(x_len)==L
    aspect_indices = jax.random.randint(k_asp, (B, LA), 1, V, dtype=jnp.int32)
    aspect_indices = aspect_indices.at[0, 3:].set(0)
    aspect_indices = aspect_indices.at[1, 2:].set(0)

    emb, params = init_params(k_par)

    out = aelstm_forward(text_raw_indices, aspect_indices, emb, params)
    out = jax.block_until_ready(out)

    ref = aelstm_reference(text_raw_indices, aspect_indices, emb, params)
    if not np.allclose(np.asarray(out), np.asarray(ref), rtol=1e-3, atol=1e-3):
        raise AssertionError(f"mismatch:\nkernel={np.asarray(out)}\nref={np.asarray(ref)}")

    print("KERNEL_OK")
</pallas_src>

<mosaic_0001>
module attributes {stable_mosaic.version = 11 : i64} {
  func.func @aelstm_kernel(%arg0: memref<16x64xf32, #tpu.memory_space<vmem>>, %arg1: memref<16x1xf32, #tpu.memory_space<vmem>>, %arg2: memref<2x32xf32, #tpu.memory_space<vmem>>, %arg3: memref<64x128xf32, #tpu.memory_space<vmem>>, %arg4: memref<32x128xf32, #tpu.memory_space<vmem>>, %arg5: memref<1x128xf32, #tpu.memory_space<vmem>>, %arg6: memref<32x32xf32, #tpu.memory_space<vmem>>, %arg7: memref<1x32xf32, #tpu.memory_space<vmem>>, %arg8: memref<1x32xf32, #tpu.memory_space<vmem>>, %arg9: memref<1x32xf32, #tpu.memory_space<vmem>>, %arg10: memref<1x1xf32, #tpu.memory_space<vmem>>, %arg11: memref<2x16xf32, #tpu.memory_space<vmem>>, %arg12: memref<32x3xf32, #tpu.memory_space<vmem>>, %arg13: memref<1x3xf32, #tpu.memory_space<vmem>>, %arg14: memref<2x3xf32, #tpu.memory_space<vmem>>, %arg15: memref<16x128xf32, #tpu.memory_space<vmem>>) attributes {dimension_semantics = [], scalar_prefetch = 0 : i64, scratch_operands = 1 : i64, tpu.core_type = #tpu.core_type<tc>} {
    %c0 = arith.constant 0 : index
    %c0_0 = arith.constant 0 : index
    %0 = vector.load %arg0[%c0, %c0_0] : memref<16x64xf32, #tpu.memory_space<vmem>>, vector<16x64xf32>
    %c0_1 = arith.constant 0 : index
    %c0_2 = arith.constant 0 : index
    %1 = vector.load %arg3[%c0_1, %c0_2] : memref<64x128xf32, #tpu.memory_space<vmem>>, vector<64x128xf32>
    %cst = arith.constant dense<0.000000e+00> : vector<16x128xf32>
    %2 = tpu.matmul %0, %1, %cst {dimension_numbers = #tpu.dot_dimension_numbers<[1], [0], [0], [1], [0, 0, 1, 1], [], []>} : vector<16x64xf32>, vector<64x128xf32>, vector<16x128xf32> -> vector<16x128xf32>
    %c0_3 = arith.constant 0 : index
    %c0_4 = arith.constant 0 : index
    %3 = vector.load %arg5[%c0_3, %c0_4] : memref<1x128xf32, #tpu.memory_space<vmem>>, vector<1x128xf32>
    %4 = vector.broadcast %3 : vector<1x128xf32> to vector<16x128xf32>
    %5 = arith.addf %2, %4 : vector<16x128xf32>
    %c0_5 = arith.constant 0 : index
    %c0_6 = arith.constant 0 : index
    %6 = vector.load %arg15[%c0_5, %c0_6] : memref<16x128xf32, #tpu.memory_space<vmem>>, vector<16x128xf32>
    tpu.vector_store %arg15[%c0_5, %c0_6], %5 {strides = array<i32>} : memref<16x128xf32, #tpu.memory_space<vmem>>, vector<16x128xf32>,
    %c0_7 = arith.constant 0 : index
    %c0_8 = arith.constant 0 : index
    %7 = vector.load %arg4[%c0_7, %c0_8] : memref<32x128xf32, #tpu.memory_space<vmem>>, vector<32x128xf32>
    %8 = tpu.iota {dimensions = array<i32: 1>} : vector<2x128xi32>
    %c64_i32 = arith.constant 64 : i32
    %9 = vector.broadcast %c64_i32 : i32 to vector<2x128xi32>
    %10 = arith.cmpi sge, %8, %9 : vector<2x128xi32>
    %c96_i32 = arith.constant 96 : i32
    %11 = vector.broadcast %c96_i32 : i32 to vector<2x128xi32>
    %12 = arith.cmpi slt, %8, %11 : vector<2x128xi32>
    %13 = arith.andi %10, %12 : vector<2x128xi1>
    %cst_9 = arith.constant 0.000000e+00 : f32
    %14 = vector.broadcast %cst_9 : f32 to vector<2x32xf32>
    %cst_10 = arith.constant 0.000000e+00 : f32
    %15 = vector.broadcast %cst_10 : f32 to vector<2x32xf32>
    %c0_11 = arith.constant 0 : index
    %c0_12 = arith.constant 0 : index
    %16 = vector.load %arg15[%c0_11, %c0_12] : memref<16x128xf32, #tpu.memory_space<vmem>>, vector<2x128xf32>
    %cst_13 = arith.constant dense<0.000000e+00> : vector<2x128xf32>
    %17 = tpu.matmul %14, %7, %cst_13 {dimension_numbers = #tpu.dot_dimension_numbers<[1], [0], [0], [1], [0, 0, 1, 1], [], []>} : vector<2x32xf32>, vector<32x128xf32>, vector<2x128xf32> -> vector<2x128xf32>
    %18 = arith.addf %16, %17 : vector<2x128xf32>
    %cst_14 = arith.constant 5.000000e-01 : f32
    %19 = vector.broadcast %cst_14 : f32 to vector<2x128xf32>
    %20 = arith.mulf %19, %18 : vector<2x128xf32>
    %21 = math.tanh %20 : vector<2x128xf32>
    %cst_15 = arith.constant 1.000000e+00 : f32
    %22 = vector.broadcast %cst_15 : f32 to vector<2x128xf32>
    %23 = arith.addf %21, %22 : vector<2x128xf32>
    %cst_16 = arith.constant 5.000000e-01 : f32
    %24 = vector.broadcast %cst_16 : f32 to vector<2x128xf32>
    %25 = arith.mulf %24, %23 : vector<2x128xf32>
    %26 = math.tanh %18 : vector<2x128xf32>
    %27 = arith.select %13, %26, %25 : vector<2x128xi1>, vector<2x128xf32>
    %28 = vector.extract_strided_slice %27 {offsets = [0, 0], sizes = [2, 32], strides = [1, 1]} : vector<2x128xf32> to vector<2x32xf32>
    %29 = vector.extract_strided_slice %27 {offsets = [0, 32], sizes = [2, 32], strides = [1, 1]} : vector<2x128xf32> to vector<2x32xf32>
    %30 = vector.extract_strided_slice %27 {offsets = [0, 64], sizes = [2, 32], strides = [1, 1]} : vector<2x128xf32> to vector<2x32xf32>
    %31 = vector.extract_strided_slice %27 {offsets = [0, 96], sizes = [2, 32], strides = [1, 1]} : vector<2x128xf32> to vector<2x32xf32>
    %32 = arith.mulf %29, %15 : vector<2x32xf32>
    %33 = arith.mulf %28, %30 : vector<2x32xf32>
    %34 = arith.addf %32, %33 : vector<2x32xf32>
    %35 = math.tanh %34 : vector<2x32xf32>
    %36 = arith.mulf %31, %35 : vector<2x32xf32>
    %c2 = arith.constant 2 : index
    %c0_17 = arith.constant 0 : index
    %37 = vector.load %arg15[%c2, %c0_17] : memref<16x128xf32, #tpu.memory_space<vmem>>, vector<2x128xf32>
    %cst_18 = arith.constant dense<0.000000e+00> : vector<2x128xf32>
    %38 = tpu.matmul %36, %7, %cst_18 {dimension_numbers = #tpu.dot_dimension_numbers<[1], [0], [0], [1], [0, 0, 1, 1], [], []>} : vector<2x32xf32>, vector<32x128xf32>, vector<2x128xf32> -> vector<2x128xf32>
    %39 = arith.addf %37, %38 : vector<2x128xf32>
    %cst_19 = arith.constant 5.000000e-01 : f32
    %40 = vector.broadcast %cst_19 : f32 to vector<2x128xf32>
    %41 = arith.mulf %40, %39 : vector<2x128xf32>
    %42 = math.tanh %41 : vector<2x128xf32>
    %cst_20 = arith.constant 1.000000e+00 : f32
    %43 = vector.broadcast %cst_20 : f32 to vector<2x128xf32>
    %44 = arith.addf %42, %43 : vector<2x128xf32>
    %cst_21 = arith.constant 5.000000e-01 : f32
    %45 = vector.broadcast %cst_21 : f32 to vector<2x128xf32>
    %46 = arith.mulf %45, %44 : vector<2x128xf32>
    %47 = math.tanh %39 : vector<2x128xf32>
    %48 = arith.select %13, %47, %46 : vector<2x128xi1>, vector<2x128xf32>
    %49 = vector.extract_strided_slice %48 {offsets = [0, 0], sizes = [2, 32], strides = [1, 1]} : vector<2x128xf32> to vector<2x32xf32>
    %50 = vector.extract_strided_slice %48 {offsets = [0, 32], sizes = [2, 32], strides = [1, 1]} : vector<2x128xf32> to vector<2x32xf32>
    %51 = vector.extract_strided_slice %48 {offsets = [0, 64], sizes = [2, 32], strides = [1, 1]} : vector<2x128xf32> to vector<2x32xf32>
    %52 = vector.extract_strided_slice %48 {offsets = [0, 96], sizes = [2, 32], strides = [1, 1]} : vector<2x128xf32> to vector<2x32xf32>
    %53 = arith.mulf %50, %34 : vector<2x32xf32>
    %54 = arith.mulf %49, %51 : vector<2x32xf32>
    %55 = arith.addf %53, %54 : vector<2x32xf32>
    %56 = math.tanh %55 : vector<2x32xf32>
    %57 = arith.mulf %52, %56 : vector<2x32xf32>
    %c4 = arith.constant 4 : index
    %c0_22 = arith.constant 0 : index
    %58 = vector.load %arg15[%c4, %c0_22] : memref<16x128xf32, #tpu.memory_space<vmem>>, vector<2x128xf32>
    %cst_23 = arith.constant dense<0.000000e+00> : vector<2x128xf32>
    %59 = tpu.matmul %57, %7, %cst_23 {dimension_numbers = #tpu.dot_dimension_numbers<[1], [0], [0], [1], [0, 0, 1, 1], [], []>} : vector<2x32xf32>, vector<32x128xf32>, vector<2x128xf32> -> vector<2x128xf32>
    %60 = arith.addf %58, %59 : vector<2x128xf32>
    %cst_24 = arith.constant 5.000000e-01 : f32
    %61 = vector.broadcast %cst_24 : f32 to vector<2x128xf32>
    %62 = arith.mulf %61, %60 : vector<2x128xf32>
    %63 = math.tanh %62 : vector<2x128xf32>
    %cst_25 = arith.constant 1.000000e+00 : f32
    %64 = vector.broadcast %cst_25 : f32 to vector<2x128xf32>
    %65 = arith.addf %63, %64 : vector<2x128xf32>
    %cst_26 = arith.constant 5.000000e-01 : f32
    %66 = vector.broadcast %cst_26 : f32 to vector<2x128xf32>
    %67 = arith.mulf %66, %65 : vector<2x128xf32>
    %68 = math.tanh %60 : vector<2x128xf32>
    %69 = arith.select %13, %68, %67 : vector<2x128xi1>, vector<2x128xf32>
    %70 = vector.extract_strided_slice %69 {offsets = [0, 0], sizes = [2, 32], strides = [1, 1]} : vector<2x128xf32> to vector<2x32xf32>
    %71 = vector.extract_strided_slice %69 {offsets = [0, 32], sizes = [2, 32], strides = [1, 1]} : vector<2x128xf32> to vector<2x32xf32>
    %72 = vector.extract_strided_slice %69 {offsets = [0, 64], sizes = [2, 32], strides = [1, 1]} : vector<2x128xf32> to vector<2x32xf32>
    %73 = vector.extract_strided_slice %69 {offsets = [0, 96], sizes = [2, 32], strides = [1, 1]} : vector<2x128xf32> to vector<2x32xf32>
    %74 = arith.mulf %71, %55 : vector<2x32xf32>
    %75 = arith.mulf %70, %72 : vector<2x32xf32>
    %76 = arith.addf %74, %75 : vector<2x32xf32>
    %77 = math.tanh %76 : vector<2x32xf32>
    %78 = arith.mulf %73, %77 : vector<2x32xf32>
    %c6 = arith.constant 6 : index
    %c0_27 = arith.constant 0 : index
    %79 = vector.load %arg15[%c6, %c0_27] : memref<16x128xf32, #tpu.memory_space<vmem>>, vector<2x128xf32>
    %cst_28 = arith.constant dense<0.000000e+00> : vector<2x128xf32>
    %80 = tpu.matmul %78, %7, %cst_28 {dimension_numbers = #tpu.dot_dimension_numbers<[1], [0], [0], [1], [0, 0, 1, 1], [], []>} : vector<2x32xf32>, vector<32x128xf32>, vector<2x128xf32> -> vector<2x128xf32>
    %81 = arith.addf %79, %80 : vector<2x128xf32>
    %cst_29 = arith.constant 5.000000e-01 : f32
    %82 = vector.broadcast %cst_29 : f32 to vector<2x128xf32>
    %83 = arith.mulf %82, %81 : vector<2x128xf32>
    %84 = math.tanh %83 : vector<2x128xf32>
    %cst_30 = arith.constant 1.000000e+00 : f32
    %85 = vector.broadcast %cst_30 : f32 to vector<2x128xf32>
    %86 = arith.addf %84, %85 : vector<2x128xf32>
    %cst_31 = arith.constant 5.000000e-01 : f32
    %87 = vector.broadcast %cst_31 : f32 to vector<2x128xf32>
    %88 = arith.mulf %87, %86 : vector<2x128xf32>
    %89 = math.tanh %81 : vector<2x128xf32>
    %90 = arith.select %13, %89, %88 : vector<2x128xi1>, vector<2x128xf32>
    %91 = vector.extract_strided_slice %90 {offsets = [0, 0], sizes = [2, 32], strides = [1, 1]} : vector<2x128xf32> to vector<2x32xf32>
    %92 = vector.extract_strided_slice %90 {offsets = [0, 32], sizes = [2, 32], strides = [1, 1]} : vector<2x128xf32> to vector<2x32xf32>
    %93 = vector.extract_strided_slice %90 {offsets = [0, 64], sizes = [2, 32], strides = [1, 1]} : vector<2x128xf32> to vector<2x32xf32>
    %94 = vector.extract_strided_slice %90 {offsets = [0, 96], sizes = [2, 32], strides = [1, 1]} : vector<2x128xf32> to vector<2x32xf32>
    %95 = arith.mulf %92, %76 : vector<2x32xf32>
    %96 = arith.mulf %91, %93 : vector<2x32xf32>
    %97 = arith.addf %95, %96 : vector<2x32xf32>
    %98 = math.tanh %97 : vector<2x32xf32>
    %99 = arith.mulf %94, %98 : vector<2x32xf32>
    %c8 = arith.constant 8 : index
    %c0_32 = arith.constant 0 : index
    %100 = vector.load %arg15[%c8, %c0_32] : memref<16x128xf32, #tpu.memory_space<vmem>>, vector<2x128xf32>
    %cst_33 = arith.constant dense<0.000000e+00> : vector<2x128xf32>
    %101 = tpu.matmul %99, %7, %cst_33 {dimension_numbers = #tpu.dot_dimension_numbers<[1], [0], [0], [1], [0, 0, 1, 1], [], []>} : vector<2x32xf32>, vector<32x128xf32>, vector<2x128xf32> -> vector<2x128xf32>
    %102 = arith.addf %100, %101 : vector<2x128xf32>
    %cst_34 = arith.constant 5.000000e-01 : f32
    %103 = vector.broadcast %cst_34 : f32 to vector<2x128xf32>
    %104 = arith.mulf %103, %102 : vector<2x128xf32>
    %105 = math.tanh %104 : vector<2x128xf32>
    %cst_35 = arith.constant 1.000000e+00 : f32
    %106 = vector.broadcast %cst_35 : f32 to vector<2x128xf32>
    %107 = arith.addf %105, %106 : vector<2x128xf32>
    %cst_36 = arith.constant 5.000000e-01 : f32
    %108 = vector.broadcast %cst_36 : f32 to vector<2x128xf32>
    %109 = arith.mulf %108, %107 : vector<2x128xf32>
    %110 = math.tanh %102 : vector<2x128xf32>
    %111 = arith.select %13, %110, %109 : vector<2x128xi1>, vector<2x128xf32>
    %112 = vector.extract_strided_slice %111 {offsets = [0, 0], sizes = [2, 32], strides = [1, 1]} : vector<2x128xf32> to vector<2x32xf32>
    %113 = vector.extract_strided_slice %111 {offsets = [0, 32], sizes = [2, 32], strides = [1, 1]} : vector<2x128xf32> to vector<2x32xf32>
    %114 = vector.extract_strided_slice %111 {offsets = [0, 64], sizes = [2, 32], strides = [1, 1]} : vector<2x128xf32> to vector<2x32xf32>
    %115 = vector.extract_strided_slice %111 {offsets = [0, 96], sizes = [2, 32], strides = [1, 1]} : vector<2x128xf32> to vector<2x32xf32>
    %116 = arith.mulf %113, %97 : vector<2x32xf32>
    %117 = arith.mulf %112, %114 : vector<2x32xf32>
    %118 = arith.addf %116, %117 : vector<2x32xf32>
    %119 = math.tanh %118 : vector<2x32xf32>
    %120 = arith.mulf %115, %119 : vector<2x32xf32>
    %c10 = arith.constant 10 : index
    %c0_37 = arith.constant 0 : index
    %121 = vector.load %arg15[%c10, %c0_37] : memref<16x128xf32, #tpu.memory_space<vmem>>, vector<2x128xf32>
    %cst_38 = arith.constant dense<0.000000e+00> : vector<2x128xf32>
    %122 = tpu.matmul %120, %7, %cst_38 {dimension_numbers = #tpu.dot_dimension_numbers<[1], [0], [0], [1], [0, 0, 1, 1], [], []>} : vector<2x32xf32>, vector<32x128xf32>, vector<2x128xf32> -> vector<2x128xf32>
    %123 = arith.addf %121, %122 : vector<2x128xf32>
    %cst_39 = arith.constant 5.000000e-01 : f32
    %124 = vector.broadcast %cst_39 : f32 to vector<2x128xf32>
    %125 = arith.mulf %124, %123 : vector<2x128xf32>
    %126 = math.tanh %125 : vector<2x128xf32>
    %cst_40 = arith.constant 1.000000e+00 : f32
    %127 = vector.broadcast %cst_40 : f32 to vector<2x128xf32>
    %128 = arith.addf %126, %127 : vector<2x128xf32>
    %cst_41 = arith.constant 5.000000e-01 : f32
    %129 = vector.broadcast %cst_41 : f32 to vector<2x128xf32>
    %130 = arith.mulf %129, %128 : vector<2x128xf32>
    %131 = math.tanh %123 : vector<2x128xf32>
    %132 = arith.select %13, %131, %130 : vector<2x128xi1>, vector<2x128xf32>
    %133 = vector.extract_strided_slice %132 {offsets = [0, 0], sizes = [2, 32], strides = [1, 1]} : vector<2x128xf32> to vector<2x32xf32>
    %134 = vector.extract_strided_slice %132 {offsets = [0, 32], sizes = [2, 32], strides = [1, 1]} : vector<2x128xf32> to vector<2x32xf32>
    %135 = vector.extract_strided_slice %132 {offsets = [0, 64], sizes = [2, 32], strides = [1, 1]} : vector<2x128xf32> to vector<2x32xf32>
    %136 = vector.extract_strided_slice %132 {offsets = [0, 96], sizes = [2, 32], strides = [1, 1]} : vector<2x128xf32> to vector<2x32xf32>
    %137 = arith.mulf %134, %118 : vector<2x32xf32>
    %138 = arith.mulf %133, %135 : vector<2x32xf32>
    %139 = arith.addf %137, %138 : vector<2x32xf32>
    %140 = math.tanh %139 : vector<2x32xf32>
    %141 = arith.mulf %136, %140 : vector<2x32xf32>
    %c12 = arith.constant 12 : index
    %c0_42 = arith.constant 0 : index
    %142 = vector.load %arg15[%c12, %c0_42] : memref<16x128xf32, #tpu.memory_space<vmem>>, vector<2x128xf32>
    %cst_43 = arith.constant dense<0.000000e+00> : vector<2x128xf32>
    %143 = tpu.matmul %141, %7, %cst_43 {dimension_numbers = #tpu.dot_dimension_numbers<[1], [0], [0], [1], [0, 0, 1, 1], [], []>} : vector<2x32xf32>, vector<32x128xf32>, vector<2x128xf32> -> vector<2x128xf32>
    %144 = arith.addf %142, %143 : vector<2x128xf32>
    %cst_44 = arith.constant 5.000000e-01 : f32
    %145 = vector.broadcast %cst_44 : f32 to vector<2x128xf32>
    %146 = arith.mulf %145, %144 : vector<2x128xf32>
    %147 = math.tanh %146 : vector<2x128xf32>
    %cst_45 = arith.constant 1.000000e+00 : f32
    %148 = vector.broadcast %cst_45 : f32 to vector<2x128xf32>
    %149 = arith.addf %147, %148 : vector<2x128xf32>
    %cst_46 = arith.constant 5.000000e-01 : f32
    %150 = vector.broadcast %cst_46 : f32 to vector<2x128xf32>
    %151 = arith.mulf %150, %149 : vector<2x128xf32>
    %152 = math.tanh %144 : vector<2x128xf32>
    %153 = arith.select %13, %152, %151 : vector<2x128xi1>, vector<2x128xf32>
    %154 = vector.extract_strided_slice %153 {offsets = [0, 0], sizes = [2, 32], strides = [1, 1]} : vector<2x128xf32> to vector<2x32xf32>
    %155 = vector.extract_strided_slice %153 {offsets = [0, 32], sizes = [2, 32], strides = [1, 1]} : vector<2x128xf32> to vector<2x32xf32>
    %156 = vector.extract_strided_slice %153 {offsets = [0, 64], sizes = [2, 32], strides = [1, 1]} : vector<2x128xf32> to vector<2x32xf32>
    %157 = vector.extract_strided_slice %153 {offsets = [0, 96], sizes = [2, 32], strides = [1, 1]} : vector<2x128xf32> to vector<2x32xf32>
    %158 = arith.mulf %155, %139 : vector<2x32xf32>
    %159 = arith.mulf %154, %156 : vector<2x32xf32>
    %160 = arith.addf %158, %159 : vector<2x32xf32>
    %161 = math.tanh %160 : vector<2x32xf32>
    %162 = arith.mulf %157, %161 : vector<2x32xf32>
    %c14 = arith.constant 14 : index
    %c0_47 = arith.constant 0 : index
    %163 = vector.load %arg15[%c14, %c0_47] : memref<16x128xf32, #tpu.memory_space<vmem>>, vector<2x128xf32>
    %cst_48 = arith.constant dense<0.000000e+00> : vector<2x128xf32>
    %164 = tpu.matmul %162, %7, %cst_48 {dimension_numbers = #tpu.dot_dimension_numbers<[1], [0], [0], [1], [0, 0, 1, 1], [], []>} : vector<2x32xf32>, vector<32x128xf32>, vector<2x128xf32> -> vector<2x128xf32>
    %165 = arith.addf %163, %164 : vector<2x128xf32>
    %cst_49 = arith.constant 5.000000e-01 : f32
    %166 = vector.broadcast %cst_49 : f32 to vector<2x128xf32>
    %167 = arith.mulf %166, %165 : vector<2x128xf32>
    %168 = math.tanh %167 : vector<2x128xf32>
    %cst_50 = arith.constant 1.000000e+00 : f32
    %169 = vector.broadcast %cst_50 : f32 to vector<2x128xf32>
    %170 = arith.addf %168, %169 : vector<2x128xf32>
    %cst_51 = arith.constant 5.000000e-01 : f32
    %171 = vector.broadcast %cst_51 : f32 to vector<2x128xf32>
    %172 = arith.mulf %171, %170 : vector<2x128xf32>
    %173 = math.tanh %165 : vector<2x128xf32>
    %174 = arith.select %13, %173, %172 : vector<2x128xi1>, vector<2x128xf32>
    %175 = vector.extract_strided_slice %174 {offsets = [0, 0], sizes = [2, 32], strides = [1, 1]} : vector<2x128xf32> to vector<2x32xf32>
    %176 = vector.extract_strided_slice %174 {offsets = [0, 32], sizes = [2, 32], strides = [1, 1]} : vector<2x128xf32> to vector<2x32xf32>
    %177 = vector.extract_strided_slice %174 {offsets = [0, 64], sizes = [2, 32], strides = [1, 1]} : vector<2x128xf32> to vector<2x32xf32>
    %178 = vector.extract_strided_slice %174 {offsets = [0, 96], sizes = [2, 32], strides = [1, 1]} : vector<2x128xf32> to vector<2x32xf32>
    %179 = arith.mulf %176, %160 : vector<2x32xf32>
    %180 = arith.mulf %175, %177 : vector<2x32xf32>
    %181 = arith.addf %179, %180 : vector<2x32xf32>
    %182 = math.tanh %181 : vector<2x32xf32>
    %183 = arith.mulf %178, %182 : vector<2x32xf32>
    %184 = tpu.concatenate %36, %57, %78, %99, %120, %141, %162, %183 in 0 : vector<2x32xf32>, vector<2x32xf32>, vector<2x32xf32>, vector<2x32xf32>, vector<2x32xf32>, vector<2x32xf32>, vector<2x32xf32>, vector<2x32xf32> -> vector<16x32xf32>
    %c0_52 = arith.constant 0 : index
    %c0_53 = arith.constant 0 : index
    %185 = vector.load %arg1[%c0_52, %c0_53] : memref<16x1xf32, #tpu.memory_space<vmem>>, vector<16x1xf32>
    %186 = vector.broadcast %185 : vector<16x1xf32> to vector<16x32xf32>
    %187 = arith.mulf %184, %186 : vector<16x32xf32>
    %c0_54 = arith.constant 0 : index
    %c0_55 = arith.constant 0 : index
    %188 = vector.load %arg6[%c0_54, %c0_55] : memref<32x32xf32, #tpu.memory_space<vmem>>, vector<32x32xf32>
    %cst_56 = arith.constant dense<0.000000e+00> : vector<16x32xf32>
    %189 = tpu.matmul %187, %188, %cst_56 {dimension_numbers = #tpu.dot_dimension_numbers<[1], [0], [0], [1], [0, 0, 1, 1], [], []>} : vector<16x32xf32>, vector<32x32xf32>, vector<16x32xf32> -> vector<16x32xf32>
    %c0_57 = arith.constant 0 : index
    %c0_58 = arith.constant 0 : index
    %190 = vector.load %arg7[%c0_57, %c0_58] : memref<1x32xf32, #tpu.memory_space<vmem>>, vector<1x32xf32>
    %191 = vector.broadcast %190 : vector<1x32xf32> to vector<16x32xf32>
    %192 = arith.addf %189, %191 : vector<16x32xf32>
    %c0_59 = arith.constant 0 : index
    %c0_60 = arith.constant 0 : index
    %193 = vector.load %arg8[%c0_59, %c0_60] : memref<1x32xf32, #tpu.memory_space<vmem>>, vector<1x32xf32>
    %194 = vector.broadcast %193 : vector<1x32xf32> to vector<16x32xf32>
    %195 = arith.mulf %192, %194 : vector<16x32xf32>
    %cst_61 = arith.constant dense<0.000000e+00> : vector<16xf32>
    %196 = vector.multi_reduction <add>, %195, %cst_61 [1] : vector<16x32xf32> to vector<16xf32>
    %197 = vector.shape_cast %196 : vector<16xf32> to vector<16x1xf32>
    %c0_62 = arith.constant 0 : index
    %c0_63 = arith.constant 0 : index
    %198 = vector.load %arg2[%c0_62, %c0_63] : memref<2x32xf32, #tpu.memory_space<vmem>>, vector<2x32xf32>
    %c0_64 = arith.constant 0 : index
    %c0_65 = arith.constant 0 : index
    %199 = vector.load %arg9[%c0_64, %c0_65] : memref<1x32xf32, #tpu.memory_space<vmem>>, vector<1x32xf32>
    %200 = vector.broadcast %199 : vector<1x32xf32> to vector<2x32xf32>
    %201 = arith.mulf %198, %200 : vector<2x32xf32>
    %cst_66 = arith.constant dense<0.000000e+00> : vector<2xf32>
    %202 = vector.multi_reduction <add>, %201, %cst_66 [1] : vector<2x32xf32> to vector<2xf32>
    %203 = vector.shape_cast %202 : vector<2xf32> to vector<2x1xf32>
    %c0_67 = arith.constant 0 : index
    %c0_68 = arith.constant 0 : index
    %204 = vector.load %arg10[%c0_67, %c0_68] : memref<1x1xf32, #tpu.memory_space<vmem>>, vector<1x1xf32>
    %205 = vector.broadcast %204 : vector<1x1xf32> to vector<2x1xf32>
    %206 = arith.addf %203, %205 : vector<2x1xf32>
    %207 = tpu.concatenate %206, %206, %206, %206, %206, %206, %206, %206 in 0 : vector<2x1xf32>, vector<2x1xf32>, vector<2x1xf32>, vector<2x1xf32>, vector<2x1xf32>, vector<2x1xf32>, vector<2x1xf32>, vector<2x1xf32> -> vector<16x1xf32>
    %208 = arith.addf %197, %207 : vector<16x1xf32>
    %209 = math.tanh %208 : vector<16x1xf32>
    %210 = math.exp %209 : vector<16x1xf32>
    %c0_69 = arith.constant 0 : index
    %c0_70 = arith.constant 0 : index
    %211 = vector.load %arg11[%c0_69, %c0_70] : memref<2x16xf32, #tpu.memory_space<vmem>>, vector<2x16xf32>
    %212 = vector.broadcast %210 : vector<16x1xf32> to vector<16x32xf32>
    %213 = arith.mulf %212, %192 : vector<16x32xf32>
    %cst_71 = arith.constant dense<0.000000e+00> : vector<2x32xf32>
    %214 = tpu.matmul %211, %213, %cst_71 {dimension_numbers = #tpu.dot_dimension_numbers<[1], [0], [0], [1], [0, 0, 1, 1], [], []>} : vector<2x16xf32>, vector<16x32xf32>, vector<2x32xf32> -> vector<2x32xf32>
    %c0_72 = arith.constant 0 : index
    %c0_73 = arith.constant 0 : index
    %215 = vector.load %arg11[%c0_72, %c0_73] : memref<2x16xf32, #tpu.memory_space<vmem>>, vector<2x16xf32>
    %cst_74 = arith.constant dense<0.000000e+00> : vector<2x1xf32>
    %216 = tpu.matmul %215, %210, %cst_74 {dimension_numbers = #tpu.dot_dimension_numbers<[1], [0], [0], [1], [0, 0, 1, 1], [], []>} : vector<2x16xf32>, vector<16x1xf32>, vector<2x1xf32> -> vector<2x1xf32>
    %217 = tpu.reciprocal %216 : vector<2x1xf32> -> vector<2x1xf32>
    %218 = vector.broadcast %217 : vector<2x1xf32> to vector<2x32xf32>
    %219 = arith.mulf %214, %218 : vector<2x32xf32>
    %c0_75 = arith.constant 0 : index
    %c0_76 = arith.constant 0 : index
    %220 = vector.load %arg12[%c0_75, %c0_76] : memref<32x3xf32, #tpu.memory_space<vmem>>, vector<32x3xf32>
    %cst_77 = arith.constant dense<0.000000e+00> : vector<2x3xf32>
    %221 = tpu.matmul %219, %220, %cst_77 {dimension_numbers = #tpu.dot_dimension_numbers<[1], [0], [0], [1], [0, 0, 1, 1], [], []>} : vector<2x32xf32>, vector<32x3xf32>, vector<2x3xf32> -> vector<2x3xf32>
    %c0_78 = arith.constant 0 : index
    %c0_79 = arith.constant 0 : index
    %222 = vector.load %arg13[%c0_78, %c0_79] : memref<1x3xf32, #tpu.memory_space<vmem>>, vector<1x3xf32>
    %223 = vector.broadcast %222 : vector<1x3xf32> to vector<2x3xf32>
    %224 = arith.addf %221, %223 : vector<2x3xf32>
    %c0_80 = arith.constant 0 : index
    %c0_81 = arith.constant 0 : index
    %225 = vector.load %arg14[%c0_80, %c0_81] : memref<2x3xf32, #tpu.memory_space<vmem>>, vector<2x3xf32>
    tpu.vector_store %arg14[%c0_80, %c0_81], %224 {strides = array<i32>} : memref<2x3xf32, #tpu.memory_space<vmem>>, vector<2x3xf32>,
    return
  }
}

</mosaic_0001>

<llo_original>
// kernel: tpu_custom_call.1
$region0: #{tpu_custom_call.1}
  #allocation0 [shape = 'u32[]', space=smem, size = 0x4, offset = 0x4, fixed_abs, tag = 'smem constant byte address 0x4 - core index']
  #allocation1 [shape = 'u32[144,128]{1,0:T(1,128)}', space=vmem, size = 0x12000, scoped, tag = 'internal scratch']
  #allocation2 [shape = 'f32[16,128]{1,0:T(8,128)}', space=vmem, size = 0x2000, scoped, tag = 'scratch operand']
  #allocation3 [shape = 'f32[1,1]{1,0:T(1,128)S(1)}', space=vmem, size = 0x200, scoped, tag = 'scoped memory for tpu_custom_call.1']
  %s0 = inlined_call_operand.hbm [shape: f32[16,64], index: 0, kind: input, shape index: {}]
  %s1 = inlined_call_operand.vmem [shape: f32[16,1], index: 1, kind: input, shape index: {}]
  %s2 = inlined_call_operand.hbm [shape: f32[2,32], index: 2, kind: input, shape index: {}]
  %s3 = inlined_call_operand.hbm [shape: f32[64,128], index: 3, kind: input, shape index: {}]
  %s4 = inlined_call_operand.vmem [shape: f32[32,128], index: 4, kind: input, shape index: {}]
  %s5 = inlined_call_operand.hbm [shape: f32[1,128], index: 5, kind: input, shape index: {}]
  %s6 = inlined_call_operand.vmem [shape: f32[32,32], index: 6, kind: input, shape index: {}]
  %s7 = inlined_call_operand.vmem [shape: f32[1,32], index: 7, kind: input, shape index: {}]
  %s8 = inlined_call_operand.hbm [shape: f32[1,32], index: 8, kind: input, shape index: {}]
  %s9 = inlined_call_operand.hbm [shape: f32[1,32], index: 9, kind: input, shape index: {}]
  %s10 = inlined_call_operand.<no memory space> [shape: f32[1,1], index: 10, kind: input, shape index: {}]
  %s11 = inlined_call_operand.vmem [shape: f32[2,16], index: 11, kind: input, shape index: {}]
  %s12 = inlined_call_operand.vmem [shape: f32[32,3], index: 12, kind: input, shape index: {}]
  %s13 = inlined_call_operand.vmem [shape: f32[1,3], index: 13, kind: input, shape index: {}]
  %s14 = inlined_call_operand.hbm [shape: f32[2,3], index: 14, kind: output, shape index: {}]
  %s15 = sld [smem:[#allocation0]]
  $region90: #{tpu_custom_call.1} parent=0
    _
  %s17 = ssub.s32 1, %s15
  %s18 = scalar_select 0, %s17, %s15
  %v19 = vstv %s10
  %20 = vst [vmem:[#allocation3] sm:$0x1] %v19
  $region1: #{tpu_custom_call.1} parent=0
    #allocation4 [shape = 'u8[8192]{0}', space=vmem, size = 0x2000, scoped, tag = 'input window, operand 0, single buffered']
    #allocation5 [shape = 's32[1]{0}', space=sflag, size = 0x4, scoped, tag = 'scoped memory for tpu_custom_call.1']
    #allocation6 [shape = 's32[1]{0}', space=sflag, size = 0x4, scoped, tag = 'scoped memory for tpu_custom_call.1']
    #allocation7 [shape = 'u8[1024]{0}', space=vmem, size = 0x400, scoped, tag = 'input window, operand 2, single buffered']
    #allocation8 [shape = 's32[1]{0}', space=sflag, size = 0x4, scoped, tag = 'scoped memory for tpu_custom_call.1']
    #allocation9 [shape = 'u8[32768]{0}', space=vmem, size = 0x8000, scoped, tag = 'input window, operand 3, single buffered']
    #allocation10 [shape = 'u8[512]{0}', space=vmem, size = 0x400, scoped, tag = 'input window, operand 5, single buffered']
    #allocation11 [shape = 's32[1]{0}', space=sflag, size = 0x4, scoped, tag = 'scoped memory for tpu_custom_call.1']
    #allocation12 [shape = 'u8[512]{0}', space=vmem, size = 0x400, scoped, tag = 'input window, operand 8, single buffered']
    #allocation13 [shape = 'u8[512]{0}', space=vmem, size = 0x400, scoped, tag = 'input window, operand 9, single buffered']
    #allocation14 [shape = 's32[1]{0}', space=sflag, size = 0x4, scoped, tag = 'scoped memory for tpu_custom_call.1']
    #allocation15 [shape = 'u8[1024]{0}', space=vmem, size = 0x400, scoped, tag = 'output window, operand 0, single buffered']
    %21 = vsyncpa [#allocation5], 0
    %22 = vsyncpa [#allocation8], 0
    %23 = vsyncpa [#allocation11], 0
    %24 = vsyncpa [#allocation14], 0
    %25 = vsyncpa [#allocation6], 0
    // Predicated region
    $region2: #{tpu_custom_call.1} parent=1 // pred_check
      _
    $region3: #{tpu_custom_call.1} parent=1 // pred_check_branch
      %27 = sbr.rel (0) target = $region5
    $region4: #{tpu_custom_call.1} parent=1 // pred_region
      %s29 = ssub.s32 256, 256
      %30 = vsyncadd [#allocation5], %s29
      %s31 = sshll.u32 [#allocation4], 4
      %s32 = int_to_ptr.vmem [resolvable:$true] %s31
      %37 = dma.hbm_to_vmem [thread:$0]  %s0, 256, %s32, [#allocation5], 128, 128, 8
    $region5: #{tpu_custom_call.1} parent=1 // pred_fallthru
      _
    // Predicated region
    $region6: #{tpu_custom_call.1} parent=1 // pred_check
      _
    $region7: #{tpu_custom_call.1} parent=1 // pred_check_branch
      %39 = sbr.rel (0) target = $region9
    $region8: #{tpu_custom_call.1} parent=1 // pred_region
      _
    $region9: #{tpu_custom_call.1} parent=1 // pred_fallthru
      _
    // Predicated region
    $region10: #{tpu_custom_call.1} parent=1 // pred_check
      _
    $region11: #{tpu_custom_call.1} parent=1 // pred_check_branch
      %41 = sbr.rel (0) target = $region13
    $region12: #{tpu_custom_call.1} parent=1 // pred_region
      %s43 = ssub.s32 32, 32
      %44 = vsyncadd [#allocation8], %s43
      %s46 = sshll.u32 [#allocation7], 4
      %s47 = int_to_ptr.vmem [resolvable:$true] %s46
      %49 = dma.hbm_to_vmem [thread:$0]  %s2, 32, %s47, [#allocation8]
    $region13: #{tpu_custom_call.1} parent=1 // pred_fallthru
      _
    // Predicated region
    $region14: #{tpu_custom_call.1} parent=1 // pred_check
      _
    $region15: #{tpu_custom_call.1} parent=1 // pred_check_branch
      %51 = sbr.rel (0) target = $region17
    $region16: #{tpu_custom_call.1} parent=1 // pred_region
      %s53 = ssub.s32 1024, 1024
      %54 = vsyncadd [#allocation8], %s53
      %s55 = sshll.u32 [#allocation9], 4
      %s56 = int_to_ptr.vmem [resolvable:$true] %s55
      %61 = dma.hbm_to_vmem [thread:$0]  %s3, 1024, %s56, [#allocation8], 128, 128, 8
    $region17: #{tpu_custom_call.1} parent=1 // pred_fallthru
      _
    // Predicated region
    $region18: #{tpu_custom_call.1} parent=1 // pred_check
      _
    $region19: #{tpu_custom_call.1} parent=1 // pred_check_branch
      %63 = sbr.rel (0) target = $region21
    $region20: #{tpu_custom_call.1} parent=1 // pred_region
      _
    $region21: #{tpu_custom_call.1} parent=1 // pred_fallthru
      _
    // Predicated region
    $region22: #{tpu_custom_call.1} parent=1 // pred_check
      _
    $region23: #{tpu_custom_call.1} parent=1 // pred_check_branch
      %65 = sbr.rel (0) target = $region25
    $region24: #{tpu_custom_call.1} parent=1 // pred_region
      %s67 = ssub.s32 16, 16
      %68 = vsyncadd [#allocation11], %s67
      %s70 = sshll.u32 [#allocation10], 4
      %s71 = int_to_ptr.vmem [resolvable:$true] %s70
      %73 = dma.hbm_to_vmem [thread:$0]  %s5, 16, %s71, [#allocation11]
    $region25: #{tpu_custom_call.1} parent=1 // pred_fallthru
      _
    // Predicated region
    $region26: #{tpu_custom_call.1} parent=1 // pred_check
      _
    $region27: #{tpu_custom_call.1} parent=1 // pred_check_branch
      %75 = sbr.rel (0) target = $region29
    $region28: #{tpu_custom_call.1} parent=1 // pred_region
      _
    $region29: #{tpu_custom_call.1} parent=1 // pred_fallthru
      _
    // Predicated region
    $region30: #{tpu_custom_call.1} parent=1 // pred_check
      _
    $region31: #{tpu_custom_call.1} parent=1 // pred_check_branch
      %77 = sbr.rel (0) target = $region33
    $region32: #{tpu_custom_call.1} parent=1 // pred_region
      _
    $region33: #{tpu_custom_call.1} parent=1 // pred_fallthru
      _
    // Predicated region
    $region34: #{tpu_custom_call.1} parent=1 // pred_check
      _
    $region35: #{tpu_custom_call.1} parent=1 // pred_check_branch
      %79 = sbr.rel (0) target = $region37
    $region36: #{tpu_custom_call.1} parent=1 // pred_region
      %s81 = ssub.s32 16, 16
      %82 = vsyncadd [#allocation11], %s81
      %s84 = sshll.u32 [#allocation12], 4
      %s85 = int_to_ptr.vmem [resolvable:$true] %s84
      %87 = dma.hbm_to_vmem [thread:$0]  %s8, 16, %s85, [#allocation11]
    $region37: #{tpu_custom_call.1} parent=1 // pred_fallthru
      _
    // Predicated region
    $region38: #{tpu_custom_call.1} parent=1 // pred_check
      _
    $region39: #{tpu_custom_call.1} parent=1 // pred_check_branch
      %89 = sbr.rel (0) target = $region41
    $region40: #{tpu_custom_call.1} parent=1 // pred_region
      %s91 = ssub.s32 16, 16
      %92 = vsyncadd [#allocation14], %s91
      %s94 = sshll.u32 [#allocation13], 4
      %s95 = int_to_ptr.vmem [resolvable:$true] %s94
      %97 = dma.hbm_to_vmem [thread:$0]  %s9, 16, %s95, [#allocation14]
    $region41: #{tpu_custom_call.1} parent=1 // pred_fallthru
      _
    // Predicated region
    $region42: #{tpu_custom_call.1} parent=1 // pred_check
      _
    $region43: #{tpu_custom_call.1} parent=1 // pred_check_branch
      %99 = sbr.rel (0) target = $region45
    $region44: #{tpu_custom_call.1} parent=1 // pred_region
      _
    $region45: #{tpu_custom_call.1} parent=1 // pred_fallthru
      _
    // Predicated region
    $region46: #{tpu_custom_call.1} parent=1 // pred_check
      _
    $region47: #{tpu_custom_call.1} parent=1 // pred_check_branch
      %101 = sbr.rel (0) target = $region49
    $region48: #{tpu_custom_call.1} parent=1 // pred_region
      _
    $region49: #{tpu_custom_call.1} parent=1 // pred_fallthru
      _
    // Predicated region
    $region50: #{tpu_custom_call.1} parent=1 // pred_check
      _
    $region51: #{tpu_custom_call.1} parent=1 // pred_check_branch
      %103 = sbr.rel (0) target = $region53
    $region52: #{tpu_custom_call.1} parent=1 // pred_region
      _
    $region53: #{tpu_custom_call.1} parent=1 // pred_fallthru
      _
    // Predicated region
    $region54: #{tpu_custom_call.1} parent=1 // pred_check
      _
    $region55: #{tpu_custom_call.1} parent=1 // pred_check_branch
      %105 = sbr.rel (0) target = $region57
    $region56: #{tpu_custom_call.1} parent=1 // pred_region
      _
    $region57: #{tpu_custom_call.1} parent=1 // pred_fallthru
      _
    // Predicated region
    $region58: #{tpu_custom_call.1} parent=1 // pred_check
      _
    $region59: #{tpu_custom_call.1} parent=1 // pred_check_branch
      %107 = sbr.rel (0) target = $region61
    $region60: #{tpu_custom_call.1} parent=1 // pred_region
      %108 = dma.done [#allocation5], 256
    $region61: #{tpu_custom_call.1} parent=1 // pred_fallthru
      _
    // Predicated region
    $region62: #{tpu_custom_call.1} parent=1 // pred_check
      _
    $region63: #{tpu_custom_call.1} parent=1 // pred_check_branch
      %110 = sbr.rel (0) target = $region65
    $region64: #{tpu_custom_call.1} parent=1 // pred_region
      %111 = dma.done [#allocation8], 32
    $region65: #{tpu_custom_call.1} parent=1 // pred_fallthru
      _
    // Predicated region
    $region66: #{tpu_custom_call.1} parent=1 // pred_check
      _
    $region67: #{tpu_custom_call.1} parent=1 // pred_check_branch
      %113 = sbr.rel (0) target = $region69
    $region68: #{tpu_custom_call.1} parent=1 // pred_region
      %114 = dma.done [#allocation8], 1024
    $region69: #{tpu_custom_call.1} parent=1 // pred_fallthru
      _
    // Predicated region
    $region70: #{tpu_custom_call.1} parent=1 // pred_check
      _
    $region71: #{tpu_custom_call.1} parent=1 // pred_check_branch
      %116 = sbr.rel (0) target = $region73
    $region72: #{tpu_custom_call.1} parent=1 // pred_region
      %117 = dma.done [#allocation11], 16
    $region73: #{tpu_custom_call.1} parent=1 // pred_fallthru
      _
    // Predicated region
    $region74: #{tpu_custom_call.1} parent=1 // pred_check
      _
    $region75: #{tpu_custom_call.1} parent=1 // pred_check_branch
      %119 = sbr.rel (0) target = $region77
    $region76: #{tpu_custom_call.1} parent=1 // pred_region
      %120 = dma.done [#allocation11], 16
    $region77: #{tpu_custom_call.1} parent=1 // pred_fallthru
      _
    // Predicated region
    $region78: #{tpu_custom_call.1} parent=1 // pred_check
      _
    $region79: #{tpu_custom_call.1} parent=1 // pred_check_branch
      %122 = sbr.rel (0) target = $region81
    $region80: #{tpu_custom_call.1} parent=1 // pred_region
      %123 = dma.done [#allocation14], 16
    $region81: #{tpu_custom_call.1} parent=1 // pred_fallthru
      _
    %v124 = vld [vmem:[#allocation4] sm:$0xff]
    %v125 = vld [vmem:[#allocation4 + $0x8] sm:$0xff]
    %v126 = vld [vmem:[#allocation9] sm:$0xff]
    %v127 = vld [vmem:[#allocation9 + $0x8] sm:$0xff]
    %v128 = vld [vmem:[#allocation9 + $0x10] sm:$0xff]
    %v129 = vld [vmem:[#allocation9 + $0x18] sm:$0xff]
    %v130 = vld [vmem:[#allocation9 + $0x20] sm:$0xff]
    %v131 = vld [vmem:[#allocation9 + $0x28] sm:$0xff]
    %v132 = vld [vmem:[#allocation9 + $0x30] sm:$0xff]
    %v133 = vld [vmem:[#allocation9 + $0x38] sm:$0xff]
    %v134 = vld [vmem:[#allocation10] sm:$0x1]
    %v136 = vlaneseq
    %v137 = vshrl.u32 %v136, 7
    %v138 = vsub.s32 0, %v137
    %v139 = vrot.slane %v134, %v138
    %vm141 = vcmask 523264
    %v143 = vsel %vm141, %v124, 0
    %v146 = vsel %vm141, %v125, 0
    %148 = vmatprep.subr.mxu0 0.0
    %149 = vmatpush1.msra.mxu0 0.0
    %150 = vmatprep.subr.mxu0 0.0
    %151 = vmatpush1.msra.mxu0 0.0
    %152 = vmatprep.subr.mxu0 0.0
    %153 = vmatpush1.msra.mxu0 0.0
    %154 = vmatprep.subr.mxu0 0.0
    %155 = vmatpush1.msra.mxu0 0.0
    %156 = vmatprep.subr.mxu0 0.0
    %157 = vmatpush1.msra.mxu0 0.0
    %158 = vmatprep.subr.mxu0 0.0
    %159 = vmatpush1.msra.mxu0 0.0
    %160 = vmatprep.subr.mxu0 0.0
    %161 = vmatpush1.msra.mxu0 0.0
    %162 = vmatprep.subr.mxu0 0.0
    %163 = vmatpush1.msra.mxu0 0.0
    %164 = vmatprep.subr.mxu0 0.0
    %165 = vmatpush1.msra.mxu0 %v133
    %166 = vmatprep.subr.mxu0 0.0
    %167 = vmatpush1.msra.mxu0 %v132
    %168 = vmatprep.subr.mxu0 0.0
    %169 = vmatpush1.msra.mxu0 %v131
    %170 = vmatprep.subr.mxu0 0.0
    %171 = vmatpush1.msra.mxu0 %v130
    %172 = vmatprep.subr.mxu0 0.0
    %173 = vmatpush1.msra.mxu0 %v129
    %174 = vmatprep.subr.mxu0 0.0
    %175 = vmatpush1.msra.mxu0 %v128
    %176 = vmatprep.subr.mxu0 0.0
    %177 = vmatpush1.msra.mxu0 %v127
    %178 = vmatprep.subr.mxu0 0.0
    %179 = vmatpush1.msra.mxu0 %v126
    %180 = vmatprep.subr.mxu0 0.0
    %181 = vmatpush2.msra.mxu0 0.0
    %182 = vmatprep.subr.mxu0 0.0
    %183 = vmatpush2.msra.mxu0 0.0
    %184 = vmatprep.subr.mxu0 0.0
    %185 = vmatpush2.msra.mxu0 0.0
    %186 = vmatprep.subr.mxu0 0.0
    %187 = vmatpush2.msra.mxu0 0.0
    %188 = vmatprep.subr.mxu0 0.0
    %189 = vmatpush2.msra.mxu0 0.0
    %190 = vmatprep.subr.mxu0 0.0
    %191 = vmatpush2.msra.mxu0 0.0
    %192 = vmatprep.subr.mxu0 0.0
    %193 = vmatpush2.msra.mxu0 0.0
    %194 = vmatprep.subr.mxu0 0.0
    %195 = vmatpush2.msra.mxu0 0.0
    %196 = vmatprep.subr.mxu0 0.0
    %197 = vmatpush2.msra.mxu0 0.0
    %198 = vmatprep.subr.mxu0 0.0
    %199 = vmatpush2.msra.mxu0 0.0
    %200 = vmatprep.subr.mxu0 0.0
    %201 = vmatpush2.msra.mxu0 0.0
    %202 = vmatprep.subr.mxu0 0.0
    %203 = vmatpush2.msra.mxu0 0.0
    %204 = vmatprep.subr.mxu0 0.0
    %205 = vmatpush2.msra.mxu0 0.0
    %206 = vmatprep.subr.mxu0 0.0
    %207 = vmatpush2.msra.mxu0 0.0
    %208 = vmatprep.subr.mxu0 0.0
    %209 = vmatpush2.msra.mxu0 0.0
    %210 = vmatprep.subr.mxu0 0.0
    %211 = vmatpush2.msra.mxu0 0.0
    %212 = vmatprep.mubr.f32.mxu0 0.0
    %213 = vmatmul.mubr.f32.gmra.mxu0 %v143
    %v214 = vpop.f32.mrf.mxu0
    %v215 = vadd.f32 %v139, %v214
    %v216 = vpop.f32.mrf.mxu0
    %217 = vmatprep.mubr.f32.mxu0 0.0
    %218 = vmatmul.mubr.f32.gmra.mxu0 %v146
    %v219 = vpop.f32.mrf.mxu0
    %v220 = vadd.f32 %v139, %v219
    %v221 = vpop.f32.mrf.mxu0
    %222 = vdwg.mxu0
    %223 = vst [vmem:[#allocation2] sm:$0xff] %v215
    %224 = vst [vmem:[#allocation2 + $0x8] sm:$0xff] %v220
    %v225 = vld [vmem:[%s4] sm:$0xff]
    %v226 = vld [vmem:[%s4 + $0x8] sm:$0xff]
    %v227 = vld [vmem:[%s4 + $0x10] sm:$0xff]
    %v228 = vld [vmem:[%s4 + $0x18] sm:$0xff]
    %v229 = vlaneseq
    %v230 = vand.u32 %v229, 127
    %vm231 = vcmp.ge.s32.totalorder %v230, 64
    %vm232 = vcmp.lt.s32.totalorder %v230, 96
    %vm233 = vmand %vm231, %vm232
    %v234 = vld [vmem:[#allocation2] sm:$0x3]
    %vm235 = vcmask 261120
    %v237 = vsel %vm235, 0.0, 0
    %239 = vmatprep.subr.mxu0 0.0
    %240 = vmatpush1.msra.mxu0 0.0
    %241 = vmatprep.subr.mxu0 0.0
    %242 = vmatpush1.msra.mxu0 0.0
    %243 = vmatprep.subr.mxu0 0.0
    %244 = vmatpush1.msra.mxu0 0.0
    %245 = vmatprep.subr.mxu0 0.0
    %246 = vmatpush1.msra.mxu0 0.0
    %247 = vmatprep.subr.mxu0 0.0
    %248 = vmatpush1.msra.mxu0 0.0
    %249 = vmatprep.subr.mxu0 0.0
    %250 = vmatpush1.msra.mxu0 0.0
    %251 = vmatprep.subr.mxu0 0.0
    %252 = vmatpush1.msra.mxu0 0.0
    %253 = vmatprep.subr.mxu0 0.0
    %254 = vmatpush1.msra.mxu0 0.0
    %255 = vmatprep.subr.mxu0 0.0
    %256 = vmatpush1.msra.mxu0 0.0
    %257 = vmatprep.subr.mxu0 0.0
    %258 = vmatpush1.msra.mxu0 0.0
    %259 = vmatprep.subr.mxu0 0.0
    %260 = vmatpush1.msra.mxu0 0.0
    %261 = vmatprep.subr.mxu0 0.0
    %262 = vmatpush1.msra.mxu0 0.0
    %263 = vmatprep.subr.mxu0 0.0
    %264 = vmatpush1.msra.mxu0 %v228
    %265 = vmatprep.subr.mxu0 0.0
    %266 = vmatpush1.msra.mxu0 %v227
    %267 = vmatprep.subr.mxu0 0.0
    %268 = vmatpush1.msra.mxu0 %v226
    %269 = vmatprep.subr.mxu0 0.0
    %270 = vmatpush1.msra.mxu0 %v225
    %271 = vmatprep.subr.mxu0 0.0
    %272 = vmatpush2.msra.mxu0 0.0
    %273 = vmatprep.subr.mxu0 0.0
    %274 = vmatpush2.msra.mxu0 0.0
    %275 = vmatprep.subr.mxu0 0.0
    %276 = vmatpush2.msra.mxu0 0.0
    %277 = vmatprep.subr.mxu0 0.0
    %278 = vmatpush2.msra.mxu0 0.0
    %279 = vmatprep.subr.mxu0 0.0
    %280 = vmatpush2.msra.mxu0 0.0
    %281 = vmatprep.subr.mxu0 0.0
    %282 = vmatpush2.msra.mxu0 0.0
    %283 = vmatprep.subr.mxu0 0.0
    %284 = vmatpush2.msra.mxu0 0.0
    %285 = vmatprep.subr.mxu0 0.0
    %286 = vmatpush2.msra.mxu0 0.0
    %287 = vmatprep.subr.mxu0 0.0
    %288 = vmatpush2.msra.mxu0 0.0
    %289 = vmatprep.subr.mxu0 0.0
    %290 = vmatpush2.msra.mxu0 0.0
    %291 = vmatprep.subr.mxu0 0.0
    %292 = vmatpush2.msra.mxu0 0.0
    %293 = vmatprep.subr.mxu0 0.0
    %294 = vmatpush2.msra.mxu0 0.0
    %295 = vmatprep.subr.mxu0 0.0
    %296 = vmatpush2.msra.mxu0 0.0
    %297 = vmatprep.subr.mxu0 0.0
    %298 = vmatpush2.msra.mxu0 0.0
    %299 = vmatprep.subr.mxu0 0.0
    %300 = vmatpush2.msra.mxu0 0.0
    %301 = vmatprep.subr.mxu0 0.0
    %302 = vmatpush2.msra.mxu0 0.0
    %303 = vmatprep.mubr.f32.mxu0 0.0
    %304 = vmatmul.mubr.f32.gmra.mxu0 %v237
    %v305 = vpop.f32.mrf.mxu0
    %v306 = vadd.f32 0.0, %v305
    %v307 = vpop.f32.mrf.mxu0
    %308 = vdwg.mxu0
    %v309 = vadd.f32 %v234, %v306
    %v310 = vmul.f32 %v309, 0.5
    %v311 = vtanh.pop %v310
    %v312 = vadd.f32 %v311, 1.0
    %v313 = vmul.f32 %v312, 0.5
    %v314 = vtanh.pop %v309
    %v315 = vsel %vm233, %v314, %v313
    %v316 = vmul.f32 %v315, 0.0
    %318 = vrot.lane.b32.xlu0 %v315, 64
    %v319 = vpop.permute.xlu0 %318
    %v321 = vmul.f32 %v315, %v319
    %323 = vrot.lane.b32.xlu0 %v321, 32
    %v324 = vpop.permute.xlu0 %323
    %v326 = vadd.f32 %v316, %v324
    %v327 = vtanh.pop %v326
    %329 = vrot.lane.b32.xlu0 %v327, 64
    %v330 = vpop.permute.xlu0 %329
    %v332 = vmul.f32 %v315, %v330
    %v333 = vld [vmem:[#allocation2 + $0x2] sm:$0x3]
    %335 = vrot.lane.b32.xlu0 %v332, 32
    %v336 = vpop.permute.xlu0 %335
    %v337 = vsel %vm235, %v336, 0
    %339 = vmatprep.subr.mxu0 0.0
    %340 = vmatpush1.msra.mxu0 0.0
    %341 = vmatprep.subr.mxu0 0.0
    %342 = vmatpush1.msra.mxu0 0.0
    %343 = vmatprep.subr.mxu0 0.0
    %344 = vmatpush1.msra.mxu0 0.0
    %345 = vmatprep.subr.mxu0 0.0
    %346 = vmatpush1.msra.mxu0 0.0
    %347 = vmatprep.subr.mxu0 0.0
    %348 = vmatpush1.msra.mxu0 0.0
    %349 = vmatprep.subr.mxu0 0.0
    %350 = vmatpush1.msra.mxu0 0.0
    %351 = vmatprep.subr.mxu0 0.0
    %352 = vmatpush1.msra.mxu0 0.0
    %353 = vmatprep.subr.mxu0 0.0
    %354 = vmatpush1.msra.mxu0 0.0
    %355 = vmatprep.subr.mxu0 0.0
    %356 = vmatpush1.msra.mxu0 0.0
    %357 = vmatprep.subr.mxu0 0.0
    %358 = vmatpush1.msra.mxu0 0.0
    %359 = vmatprep.subr.mxu0 0.0
    %360 = vmatpush1.msra.mxu0 0.0
    %361 = vmatprep.subr.mxu0 0.0
    %362 = vmatpush1.msra.mxu0 0.0
    %363 = vmatprep.subr.mxu0 0.0
    %364 = vmatpush1.msra.mxu0 %v228
    %365 = vmatprep.subr.mxu0 0.0
    %366 = vmatpush1.msra.mxu0 %v227
    %367 = vmatprep.subr.mxu0 0.0
    %368 = vmatpush1.msra.mxu0 %v226
    %369 = vmatprep.subr.mxu0 0.0
    %370 = vmatpush1.msra.mxu0 %v225
    %371 = vmatprep.subr.mxu0 0.0
    %372 = vmatpush2.msra.mxu0 0.0
    %373 = vmatprep.subr.mxu0 0.0
    %374 = vmatpush2.msra.mxu0 0.0
    %375 = vmatprep.subr.mxu0 0.0
    %376 = vmatpush2.msra.mxu0 0.0
    %377 = vmatprep.subr.mxu0 0.0
    %378 = vmatpush2.msra.mxu0 0.0
    %379 = vmatprep.subr.mxu0 0.0
    %380 = vmatpush2.msra.mxu0 0.0
    %381 = vmatprep.subr.mxu0 0.0
    %382 = vmatpush2.msra.mxu0 0.0
    %383 = vmatprep.subr.mxu0 0.0
    %384 = vmatpush2.msra.mxu0 0.0
    %385 = vmatprep.subr.mxu0 0.0
    %386 = vmatpush2.msra.mxu0 0.0
    %387 = vmatprep.subr.mxu0 0.0
    %388 = vmatpush2.msra.mxu0 0.0
    %389 = vmatprep.subr.mxu0 0.0
    %390 = vmatpush2.msra.mxu0 0.0
    %391 = vmatprep.subr.mxu0 0.0
    %392 = vmatpush2.msra.mxu0 0.0
    %393 = vmatprep.subr.mxu0 0.0
    %394 = vmatpush2.msra.mxu0 0.0
    %395 = vmatprep.subr.mxu0 0.0
    %396 = vmatpush2.msra.mxu0 0.0
    %397 = vmatprep.subr.mxu0 0.0
    %398 = vmatpush2.msra.mxu0 0.0
    %399 = vmatprep.subr.mxu0 0.0
    %400 = vmatpush2.msra.mxu0 0.0
    %401 = vmatprep.subr.mxu0 0.0
    %402 = vmatpush2.msra.mxu0 0.0
    %403 = vmatprep.mubr.f32.mxu0 0.0
    %404 = vmatmul.mubr.f32.gmra.mxu0 %v337
    %v405 = vpop.f32.mrf.mxu0
    %v406 = vadd.f32 0.0, %v405
    %v407 = vpop.f32.mrf.mxu0
    %408 = vdwg.mxu0
    %v409 = vadd.f32 %v333, %v406
    %v410 = vmul.f32 %v409, 0.5
    %v411 = vtanh.pop %v410
    %v412 = vadd.f32 %v411, 1.0
    %v413 = vmul.f32 %v412, 0.5
    %v414 = vtanh.pop %v409
    %v415 = vsel %vm233, %v414, %v413
    %v416 = vmul.f32 %v415, %v326
    %418 = vrot.lane.b32.xlu0 %v415, 64
    %v419 = vpop.permute.xlu0 %418
    %v421 = vmul.f32 %v415, %v419
    %423 = vrot.lane.b32.xlu0 %v421, 32
    %v424 = vpop.permute.xlu0 %423
    %v426 = vadd.f32 %v416, %v424
    %v427 = vtanh.pop %v426
    %429 = vrot.lane.b32.xlu0 %v427, 64
    %v430 = vpop.permute.xlu0 %429
    %v432 = vmul.f32 %v415, %v430
    %v433 = vld [vmem:[#allocation2 + $0x4] sm:$0x3]
    %435 = vrot.lane.b32.xlu0 %v432, 32
    %v436 = vpop.permute.xlu0 %435
    %v437 = vsel %vm235, %v436, 0
    %439 = vmatprep.subr.mxu0 0.0
    %440 = vmatpush1.msra.mxu0 0.0
    %441 = vmatprep.subr.mxu0 0.0
    %442 = vmatpush1.msra.mxu0 0.0
    %443 = vmatprep.subr.mxu0 0.0
    %444 = vmatpush1.msra.mxu0 0.0
    %445 = vmatprep.subr.mxu0 0.0
    %446 = vmatpush1.msra.mxu0 0.0
    %447 = vmatprep.subr.mxu0 0.0
    %448 = vmatpush1.msra.mxu0 0.0
    %449 = vmatprep.subr.mxu0 0.0
    %450 = vmatpush1.msra.mxu0 0.0
    %451 = vmatprep.subr.mxu0 0.0
    %452 = vmatpush1.msra.mxu0 0.0
    %453 = vmatprep.subr.mxu0 0.0
    %454 = vmatpush1.msra.mxu0 0.0
    %455 = vmatprep.subr.mxu0 0.0
    %456 = vmatpush1.msra.mxu0 0.0
    %457 = vmatprep.subr.mxu0 0.0
    %458 = vmatpush1.msra.mxu0 0.0
    %459 = vmatprep.subr.mxu0 0.0
    %460 = vmatpush1.msra.mxu0 0.0
    %461 = vmatprep.subr.mxu0 0.0
    %462 = vmatpush1.msra.mxu0 0.0
    %463 = vmatprep.subr.mxu0 0.0
    %464 = vmatpush1.msra.mxu0 %v228
    %465 = vmatprep.subr.mxu0 0.0
    %466 = vmatpush1.msra.mxu0 %v227
    %467 = vmatprep.subr.mxu0 0.0
    %468 = vmatpush1.msra.mxu0 %v226
    %469 = vmatprep.subr.mxu0 0.0
    %470 = vmatpush1.msra.mxu0 %v225
    %471 = vmatprep.subr.mxu0 0.0
    %472 = vmatpush2.msra.mxu0 0.0
    %473 = vmatprep.subr.mxu0 0.0
    %474 = vmatpush2.msra.mxu0 0.0
    %475 = vmatprep.subr.mxu0 0.0
    %476 = vmatpush2.msra.mxu0 0.0
    %477 = vmatprep.subr.mxu0 0.0
    %478 = vmatpush2.msra.mxu0 0.0
    %479 = vmatprep.subr.mxu0 0.0
    %480 = vmatpush2.msra.mxu0 0.0
    %481 = vmatprep.subr.mxu0 0.0
    %482 = vmatpush2.msra.mxu0 0.0
    %483 = vmatprep.subr.mxu0 0.0
    %484 = vmatpush2.msra.mxu0 0.0
    %485 = vmatprep.subr.mxu0 0.0
    %486 = vmatpush2.msra.mxu0 0.0
    %487 = vmatprep.subr.mxu0 0.0
    %488 = vmatpush2.msra.mxu0 0.0
    %489 = vmatprep.subr.mxu0 0.0
    %490 = vmatpush2.msra.mxu0 0.0
    %491 = vmatprep.subr.mxu0 0.0
    %492 = vmatpush2.msra.mxu0 0.0
    %493 = vmatprep.subr.mxu0 0.0
    %494 = vmatpush2.msra.mxu0 0.0
    %495 = vmatprep.subr.mxu0 0.0
    %496 = vmatpush2.msra.mxu0 0.0
    %497 = vmatprep.subr.mxu0 0.0
    %498 = vmatpush2.msra.mxu0 0.0
    %499 = vmatprep.subr.mxu0 0.0
    %500 = vmatpush2.msra.mxu0 0.0
    %501 = vmatprep.subr.mxu0 0.0
    %502 = vmatpush2.msra.mxu0 0.0
    %503 = vmatprep.mubr.f32.mxu0 0.0
    %504 = vmatmul.mubr.f32.gmra.mxu0 %v437
    %v505 = vpop.f32.mrf.mxu0
    %v506 = vadd.f32 0.0, %v505
    %v507 = vpop.f32.mrf.mxu0
    %508 = vdwg.mxu0
    %v509 = vadd.f32 %v433, %v506
    %v510 = vmul.f32 %v509, 0.5
    %v511 = vtanh.pop %v510
    %v512 = vadd.f32 %v511, 1.0
    %v513 = vmul.f32 %v512, 0.5
    %v514 = vtanh.pop %v509
    %v515 = vsel %vm233, %v514, %v513
    %v516 = vmul.f32 %v515, %v426
    %518 = vrot.lane.b32.xlu0 %v515, 64
    %v519 = vpop.permute.xlu0 %518
    %v521 = vmul.f32 %v515, %v519
    %523 = vrot.lane.b32.xlu0 %v521, 32
    %v524 = vpop.permute.xlu0 %523
    %v526 = vadd.f32 %v516, %v524
    %v527 = vtanh.pop %v526
    %529 = vrot.lane.b32.xlu0 %v527, 64
    %v530 = vpop.permute.xlu0 %529
    %v532 = vmul.f32 %v515, %v530
    %v533 = vld [vmem:[#allocation2 + $0x6] sm:$0x3]
    %535 = vrot.lane.b32.xlu0 %v532, 32
    %v536 = vpop.permute.xlu0 %535
    %v537 = vsel %vm235, %v536, 0
    %539 = vmatprep.subr.mxu0 0.0
    %540 = vmatpush1.msra.mxu0 0.0
    %541 = vmatprep.subr.mxu0 0.0
    %542 = vmatpush1.msra.mxu0 0.0
    %543 = vmatprep.subr.mxu0 0.0
    %544 = vmatpush1.msra.mxu0 0.0
    %545 = vmatprep.subr.mxu0 0.0
    %546 = vmatpush1.msra.mxu0 0.0
    %547 = vmatprep.subr.mxu0 0.0
    %548 = vmatpush1.msra.mxu0 0.0
    %549 = vmatprep.subr.mxu0 0.0
    %550 = vmatpush1.msra.mxu0 0.0
    %551 = vmatprep.subr.mxu0 0.0
    %552 = vmatpush1.msra.mxu0 0.0
    %553 = vmatprep.subr.mxu0 0.0
    %554 = vmatpush1.msra.mxu0 0.0
    %555 = vmatprep.subr.mxu0 0.0
    %556 = vmatpush1.msra.mxu0 0.0
    %557 = vmatprep.subr.mxu0 0.0
    %558 = vmatpush1.msra.mxu0 0.0
    %559 = vmatprep.subr.mxu0 0.0
    %560 = vmatpush1.msra.mxu0 0.0
    %561 = vmatprep.subr.mxu0 0.0
    %562 = vmatpush1.msra.mxu0 0.0
    %563 = vmatprep.subr.mxu0 0.0
    %564 = vmatpush1.msra.mxu0 %v228
    %565 = vmatprep.subr.mxu0 0.0
    %566 = vmatpush1.msra.mxu0 %v227
    %567 = vmatprep.subr.mxu0 0.0
    %568 = vmatpush1.msra.mxu0 %v226
    %569 = vmatprep.subr.mxu0 0.0
    %570 = vmatpush1.msra.mxu0 %v225
    %571 = vmatprep.subr.mxu0 0.0
    %572 = vmatpush2.msra.mxu0 0.0
    %573 = vmatprep.subr.mxu0 0.0
    %574 = vmatpush2.msra.mxu0 0.0
    %575 = vmatprep.subr.mxu0 0.0
    %576 = vmatpush2.msra.mxu0 0.0
    %577 = vmatprep.subr.mxu0 0.0
    %578 = vmatpush2.msra.mxu0 0.0
    %579 = vmatprep.subr.mxu0 0.0
    %580 = vmatpush2.msra.mxu0 0.0
    %581 = vmatprep.subr.mxu0 0.0
    %582 = vmatpush2.msra.mxu0 0.0
    %583 = vmatprep.subr.mxu0 0.0
    %584 = vmatpush2.msra.mxu0 0.0
    %585 = vmatprep.subr.mxu0 0.0
    %586 = vmatpush2.msra.mxu0 0.0
    %587 = vmatprep.subr.mxu0 0.0
    %588 = vmatpush2.msra.mxu0 0.0
    %589 = vmatprep.subr.mxu0 0.0
    %590 = vmatpush2.msra.mxu0 0.0
    %591 = vmatprep.subr.mxu0 0.0
    %592 = vmatpush2.msra.mxu0 0.0
    %593 = vmatprep.subr.mxu0 0.0
    %594 = vmatpush2.msra.mxu0 0.0
    %595 = vmatprep.subr.mxu0 0.0
    %596 = vmatpush2.msra.mxu0 0.0
    %597 = vmatprep.subr.mxu0 0.0
    %598 = vmatpush2.msra.mxu0 0.0
    %599 = vmatprep.subr.mxu0 0.0
    %600 = vmatpush2.msra.mxu0 0.0
    %601 = vmatprep.subr.mxu0 0.0
    %602 = vmatpush2.msra.mxu0 0.0
    %603 = vmatprep.mubr.f32.mxu0 0.0
    %604 = vmatmul.mubr.f32.gmra.mxu0 %v537
    %v605 = vpop.f32.mrf.mxu0
    %v606 = vadd.f32 0.0, %v605
    %v607 = vpop.f32.mrf.mxu0
    %608 = vdwg.mxu0
    %v609 = vadd.f32 %v533, %v606
    %v610 = vmul.f32 %v609, 0.5
    %v611 = vtanh.pop %v610
    %v612 = vadd.f32 %v611, 1.0
    %v613 = vmul.f32 %v612, 0.5
    %v614 = vtanh.pop %v609
    %v615 = vsel %vm233, %v614, %v613
    %v616 = vmul.f32 %v615, %v526
    %618 = vrot.lane.b32.xlu0 %v615, 64
    %v619 = vpop.permute.xlu0 %618
    %v621 = vmul.f32 %v615, %v619
    %623 = vrot.lane.b32.xlu0 %v621, 32
    %v624 = vpop.permute.xlu0 %623
    %v626 = vadd.f32 %v616, %v624
    %v627 = vtanh.pop %v626
    %629 = vrot.lane.b32.xlu0 %v627, 64
    %v630 = vpop.permute.xlu0 %629
    %v632 = vmul.f32 %v615, %v630
    %v633 = vld [vmem:[#allocation2 + $0x8] sm:$0x3]
    %635 = vrot.lane.b32.xlu0 %v632, 32
    %v636 = vpop.permute.xlu0 %635
    %v637 = vsel %vm235, %v636, 0
    %639 = vmatprep.subr.mxu0 0.0
    %640 = vmatpush1.msra.mxu0 0.0
    %641 = vmatprep.subr.mxu0 0.0
    %642 = vmatpush1.msra.mxu0 0.0
    %643 = vmatprep.subr.mxu0 0.0
    %644 = vmatpush1.msra.mxu0 0.0
    %645 = vmatprep.subr.mxu0 0.0
    %646 = vmatpush1.msra.mxu0 0.0
    %647 = vmatprep.subr.mxu0 0.0
    %648 = vmatpush1.msra.mxu0 0.0
    %649 = vmatprep.subr.mxu0 0.0
    %650 = vmatpush1.msra.mxu0 0.0
    %651 = vmatprep.subr.mxu0 0.0
    %652 = vmatpush1.msra.mxu0 0.0
    %653 = vmatprep.subr.mxu0 0.0
    %654 = vmatpush1.msra.mxu0 0.0
    %655 = vmatprep.subr.mxu0 0.0
    %656 = vmatpush1.msra.mxu0 0.0
    %657 = vmatprep.subr.mxu0 0.0
    %658 = vmatpush1.msra.mxu0 0.0
    %659 = vmatprep.subr.mxu0 0.0
    %660 = vmatpush1.msra.mxu0 0.0
    %661 = vmatprep.subr.mxu0 0.0
    %662 = vmatpush1.msra.mxu0 0.0
    %663 = vmatprep.subr.mxu0 0.0
    %664 = vmatpush1.msra.mxu0 %v228
    %665 = vmatprep.subr.mxu0 0.0
    %666 = vmatpush1.msra.mxu0 %v227
    %667 = vmatprep.subr.mxu0 0.0
    %668 = vmatpush1.msra.mxu0 %v226
    %669 = vmatprep.subr.mxu0 0.0
    %670 = vmatpush1.msra.mxu0 %v225
    %671 = vmatprep.subr.mxu0 0.0
    %672 = vmatpush2.msra.mxu0 0.0
    %673 = vmatprep.subr.mxu0 0.0
    %674 = vmatpush2.msra.mxu0 0.0
    %675 = vmatprep.subr.mxu0 0.0
    %676 = vmatpush2.msra.mxu0 0.0
    %677 = vmatprep.subr.mxu0 0.0
    %678 = vmatpush2.msra.mxu0 0.0
    %679 = vmatprep.subr.mxu0 0.0
    %680 = vmatpush2.msra.mxu0 0.0
    %681 = vmatprep.subr.mxu0 0.0
    %682 = vmatpush2.msra.mxu0 0.0
    %683 = vmatprep.subr.mxu0 0.0
    %684 = vmatpush2.msra.mxu0 0.0
    %685 = vmatprep.subr.mxu0 0.0
    %686 = vmatpush2.msra.mxu0 0.0
    %687 = vmatprep.subr.mxu0 0.0
    %688 = vmatpush2.msra.mxu0 0.0
    %689 = vmatprep.subr.mxu0 0.0
    %690 = vmatpush2.msra.mxu0 0.0
    %691 = vmatprep.subr.mxu0 0.0
    %692 = vmatpush2.msra.mxu0 0.0
    %693 = vmatprep.subr.mxu0 0.0
    %694 = vmatpush2.msra.mxu0 0.0
    %695 = vmatprep.subr.mxu0 0.0
    %696 = vmatpush2.msra.mxu0 0.0
    %697 = vmatprep.subr.mxu0 0.0
    %698 = vmatpush2.msra.mxu0 0.0
    %699 = vmatprep.subr.mxu0 0.0
    %700 = vmatpush2.msra.mxu0 0.0
    %701 = vmatprep.subr.mxu0 0.0
    %702 = vmatpush2.msra.mxu0 0.0
    %703 = vmatprep.mubr.f32.mxu0 0.0
    %704 = vmatmul.mubr.f32.gmra.mxu0 %v637
    %v705 = vpop.f32.mrf.mxu0
    %v706 = vadd.f32 0.0, %v705
    %v707 = vpop.f32.mrf.mxu0
    %708 = vdwg.mxu0
    %v709 = vadd.f32 %v633, %v706
    %v710 = vmul.f32 %v709, 0.5
    %v711 = vtanh.pop %v710
    %v712 = vadd.f32 %v711, 1.0
    %v713 = vmul.f32 %v712, 0.5
    %v714 = vtanh.pop %v709
    %v715 = vsel %vm233, %v714, %v713
    %v716 = vmul.f32 %v715, %v626
    %718 = vrot.lane.b32.xlu0 %v715, 64
    %v719 = vpop.permute.xlu0 %718
    %v721 = vmul.f32 %v715, %v719
    %723 = vrot.lane.b32.xlu0 %v721, 32
    %v724 = vpop.permute.xlu0 %723
    %v726 = vadd.f32 %v716, %v724
    %v727 = vtanh.pop %v726
    %729 = vrot.lane.b32.xlu0 %v727, 64
    %v730 = vpop.permute.xlu0 %729
    %v732 = vmul.f32 %v715, %v730
    %v733 = vld [vmem:[#allocation2 + $0xa] sm:$0x3]
    %735 = vrot.lane.b32.xlu0 %v732, 32
    %v736 = vpop.permute.xlu0 %735
    %v737 = vsel %vm235, %v736, 0
    %739 = vmatprep.subr.mxu0 0.0
    %740 = vmatpush1.msra.mxu0 0.0
    %741 = vmatprep.subr.mxu0 0.0
    %742 = vmatpush1.msra.mxu0 0.0
    %743 = vmatprep.subr.mxu0 0.0
    %744 = vmatpush1.msra.mxu0 0.0
    %745 = vmatprep.subr.mxu0 0.0
    %746 = vmatpush1.msra.mxu0 0.0
    %747 = vmatprep.subr.mxu0 0.0
    %748 = vmatpush1.msra.mxu0 0.0
    %749 = vmatprep.subr.mxu0 0.0
    %750 = vmatpush1.msra.mxu0 0.0
    %751 = vmatprep.subr.mxu0 0.0
    %752 = vmatpush1.msra.mxu0 0.0
    %753 = vmatprep.subr.mxu0 0.0
    %754 = vmatpush1.msra.mxu0 0.0
    %755 = vmatprep.subr.mxu0 0.0
    %756 = vmatpush1.msra.mxu0 0.0
    %757 = vmatprep.subr.mxu0 0.0
    %758 = vmatpush1.msra.mxu0 0.0
    %759 = vmatprep.subr.mxu0 0.0
    %760 = vmatpush1.msra.mxu0 0.0
    %761 = vmatprep.subr.mxu0 0.0
    %762 = vmatpush1.msra.mxu0 0.0
    %763 = vmatprep.subr.mxu0 0.0
    %764 = vmatpush1.msra.mxu0 %v228
    %765 = vmatprep.subr.mxu0 0.0
    %766 = vmatpush1.msra.mxu0 %v227
    %767 = vmatprep.subr.mxu0 0.0
    %768 = vmatpush1.msra.mxu0 %v226
    %769 = vmatprep.subr.mxu0 0.0
    %770 = vmatpush1.msra.mxu0 %v225
    %771 = vmatprep.subr.mxu0 0.0
    %772 = vmatpush2.msra.mxu0 0.0
    %773 = vmatprep.subr.mxu0 0.0
    %774 = vmatpush2.msra.mxu0 0.0
    %775 = vmatprep.subr.mxu0 0.0
    %776 = vmatpush2.msra.mxu0 0.0
    %777 = vmatprep.subr.mxu0 0.0
    %778 = vmatpush2.msra.mxu0 0.0
    %779 = vmatprep.subr.mxu0 0.0
    %780 = vmatpush2.msra.mxu0 0.0
    %781 = vmatprep.subr.mxu0 0.0
    %782 = vmatpush2.msra.mxu0 0.0
    %783 = vmatprep.subr.mxu0 0.0
    %784 = vmatpush2.msra.mxu0 0.0
    %785 = vmatprep.subr.mxu0 0.0
    %786 = vmatpush2.msra.mxu0 0.0
    %787 = vmatprep.subr.mxu0 0.0
    %788 = vmatpush2.msra.mxu0 0.0
    %789 = vmatprep.subr.mxu0 0.0
    %790 = vmatpush2.msra.mxu0 0.0
    %791 = vmatprep.subr.mxu0 0.0
    %792 = vmatpush2.msra.mxu0 0.0
    %793 = vmatprep.subr.mxu0 0.0
    %794 = vmatpush2.msra.mxu0 0.0
    %795 = vmatprep.subr.mxu0 0.0
    %796 = vmatpush2.msra.mxu0 0.0
    %797 = vmatprep.subr.mxu0 0.0
    %798 = vmatpush2.msra.mxu0 0.0
    %799 = vmatprep.subr.mxu0 0.0
    %800 = vmatpush2.msra.mxu0 0.0
    %801 = vmatprep.subr.mxu0 0.0
    %802 = vmatpush2.msra.mxu0 0.0
    %803 = vmatprep.mubr.f32.mxu0 0.0
    %804 = vmatmul.mubr.f32.gmra.mxu0 %v737
    %v805 = vpop.f32.mrf.mxu0
    %v806 = vadd.f32 0.0, %v805
    %v807 = vpop.f32.mrf.mxu0
    %808 = vdwg.mxu0
    %v809 = vadd.f32 %v733, %v806
    %v810 = vmul.f32 %v809, 0.5
    %v811 = vtanh.pop %v810
    %v812 = vadd.f32 %v811, 1.0
    %v813 = vmul.f32 %v812, 0.5
    %v814 = vtanh.pop %v809
    %v815 = vsel %vm233, %v814, %v813
    %v816 = vmul.f32 %v815, %v726
    %818 = vrot.lane.b32.xlu0 %v815, 64
    %v819 = vpop.permute.xlu0 %818
    %v821 = vmul.f32 %v815, %v819
    %823 = vrot.lane.b32.xlu0 %v821, 32
    %v824 = vpop.permute.xlu0 %823
    %v826 = vadd.f32 %v816, %v824
    %v827 = vtanh.pop %v826
    %829 = vrot.lane.b32.xlu0 %v827, 64
    %v830 = vpop.permute.xlu0 %829
    %v832 = vmul.f32 %v815, %v830
    %v833 = vld [vmem:[#allocation2 + $0xc] sm:$0x3]
    %835 = vrot.lane.b32.xlu0 %v832, 32
    %v836 = vpop.permute.xlu0 %835
    %v837 = vsel %vm235, %v836, 0
    %839 = vmatprep.subr.mxu0 0.0
    %840 = vmatpush1.msra.mxu0 0.0
    %841 = vmatprep.subr.mxu0 0.0
    %842 = vmatpush1.msra.mxu0 0.0
    %843 = vmatprep.subr.mxu0 0.0
    %844 = vmatpush1.msra.mxu0 0.0
    %845 = vmatprep.subr.mxu0 0.0
    %846 = vmatpush1.msra.mxu0 0.0
    %847 = vmatprep.subr.mxu0 0.0
    %848 = vmatpush1.msra.mxu0 0.0
    %849 = vmatprep.subr.mxu0 0.0
    %850 = vmatpush1.msra.mxu0 0.0
    %851 = vmatprep.subr.mxu0 0.0
    %852 = vmatpush1.msra.mxu0 0.0
    %853 = vmatprep.subr.mxu0 0.0
    %854 = vmatpush1.msra.mxu0 0.0
    %855 = vmatprep.subr.mxu0 0.0
    %856 = vmatpush1.msra.mxu0 0.0
    %857 = vmatprep.subr.mxu0 0.0
    %858 = vmatpush1.msra.mxu0 0.0
    %859 = vmatprep.subr.mxu0 0.0
    %860 = vmatpush1.msra.mxu0 0.0
    %861 = vmatprep.subr.mxu0 0.0
    %862 = vmatpush1.msra.mxu0 0.0
    %863 = vmatprep.subr.mxu0 0.0
    %864 = vmatpush1.msra.mxu0 %v228
    %865 = vmatprep.subr.mxu0 0.0
    %866 = vmatpush1.msra.mxu0 %v227
    %867 = vmatprep.subr.mxu0 0.0
    %868 = vmatpush1.msra.mxu0 %v226
    %869 = vmatprep.subr.mxu0 0.0
    %870 = vmatpush1.msra.mxu0 %v225
    %871 = vmatprep.subr.mxu0 0.0
    %872 = vmatpush2.msra.mxu0 0.0
    %873 = vmatprep.subr.mxu0 0.0
    %874 = vmatpush2.msra.mxu0 0.0
    %875 = vmatprep.subr.mxu0 0.0
    %876 = vmatpush2.msra.mxu0 0.0
    %877 = vmatprep.subr.mxu0 0.0
    %878 = vmatpush2.msra.mxu0 0.0
    %879 = vmatprep.subr.mxu0 0.0
    %880 = vmatpush2.msra.mxu0 0.0
    %881 = vmatprep.subr.mxu0 0.0
    %882 = vmatpush2.msra.mxu0 0.0
    %883 = vmatprep.subr.mxu0 0.0
    %884 = vmatpush2.msra.mxu0 0.0
    %885 = vmatprep.subr.mxu0 0.0
    %886 = vmatpush2.msra.mxu0 0.0
    %887 = vmatprep.subr.mxu0 0.0
    %888 = vmatpush2.msra.mxu0 0.0
    %889 = vmatprep.subr.mxu0 0.0
    %890 = vmatpush2.msra.mxu0 0.0
    %891 = vmatprep.subr.mxu0 0.0
    %892 = vmatpush2.msra.mxu0 0.0
    %893 = vmatprep.subr.mxu0 0.0
    %894 = vmatpush2.msra.mxu0 0.0
    %895 = vmatprep.subr.mxu0 0.0
    %896 = vmatpush2.msra.mxu0 0.0
    %897 = vmatprep.subr.mxu0 0.0
    %898 = vmatpush2.msra.mxu0 0.0
    %899 = vmatprep.subr.mxu0 0.0
    %900 = vmatpush2.msra.mxu0 0.0
    %901 = vmatprep.subr.mxu0 0.0
    %902 = vmatpush2.msra.mxu0 0.0
    %903 = vmatprep.mubr.f32.mxu0 0.0
    %904 = vmatmul.mubr.f32.gmra.mxu0 %v837
    %v905 = vpop.f32.mrf.mxu0
    %v906 = vadd.f32 0.0, %v905
    %v907 = vpop.f32.mrf.mxu0
    %908 = vdwg.mxu0
    %v909 = vadd.f32 %v833, %v906
    %v910 = vmul.f32 %v909, 0.5
    %v911 = vtanh.pop %v910
    %v912 = vadd.f32 %v911, 1.0
    %v913 = vmul.f32 %v912, 0.5
    %v914 = vtanh.pop %v909
    %v915 = vsel %vm233, %v914, %v913
    %v916 = vmul.f32 %v915, %v826
    %918 = vrot.lane.b32.xlu0 %v915, 64
    %v919 = vpop.permute.xlu0 %918
    %v921 = vmul.f32 %v915, %v919
    %923 = vrot.lane.b32.xlu0 %v921, 32
    %v924 = vpop.permute.xlu0 %923
    %v926 = vadd.f32 %v916, %v924
    %v927 = vtanh.pop %v926
    %929 = vrot.lane.b32.xlu0 %v927, 64
    %v930 = vpop.permute.xlu0 %929
    %v932 = vmul.f32 %v915, %v930
    %v933 = vld [vmem:[#allocation2 + $0xe] sm:$0x3]
    %935 = vrot.lane.b32.xlu0 %v932, 32
    %v936 = vpop.permute.xlu0 %935
    %v937 = vsel %vm235, %v936, 0
    %939 = vmatprep.subr.mxu0 0.0
    %940 = vmatpush1.msra.mxu0 0.0
    %941 = vmatprep.subr.mxu0 0.0
    %942 = vmatpush1.msra.mxu0 0.0
    %943 = vmatprep.subr.mxu0 0.0
    %944 = vmatpush1.msra.mxu0 0.0
    %945 = vmatprep.subr.mxu0 0.0
    %946 = vmatpush1.msra.mxu0 0.0
    %947 = vmatprep.subr.mxu0 0.0
    %948 = vmatpush1.msra.mxu0 0.0
    %949 = vmatprep.subr.mxu0 0.0
    %950 = vmatpush1.msra.mxu0 0.0
    %951 = vmatprep.subr.mxu0 0.0
    %952 = vmatpush1.msra.mxu0 0.0
    %953 = vmatprep.subr.mxu0 0.0
    %954 = vmatpush1.msra.mxu0 0.0
    %955 = vmatprep.subr.mxu0 0.0
    %956 = vmatpush1.msra.mxu0 0.0
    %957 = vmatprep.subr.mxu0 0.0
    %958 = vmatpush1.msra.mxu0 0.0
    %959 = vmatprep.subr.mxu0 0.0
    %960 = vmatpush1.msra.mxu0 0.0
    %961 = vmatprep.subr.mxu0 0.0
    %962 = vmatpush1.msra.mxu0 0.0
    %963 = vmatprep.subr.mxu0 0.0
    %964 = vmatpush1.msra.mxu0 %v228
    %965 = vmatprep.subr.mxu0 0.0
    %966 = vmatpush1.msra.mxu0 %v227
    %967 = vmatprep.subr.mxu0 0.0
    %968 = vmatpush1.msra.mxu0 %v226
    %969 = vmatprep.subr.mxu0 0.0
    %970 = vmatpush1.msra.mxu0 %v225
    %971 = vmatprep.subr.mxu0 0.0
    %972 = vmatpush2.msra.mxu0 0.0
    %973 = vmatprep.subr.mxu0 0.0
    %974 = vmatpush2.msra.mxu0 0.0
    %975 = vmatprep.subr.mxu0 0.0
    %976 = vmatpush2.msra.mxu0 0.0
    %977 = vmatprep.subr.mxu0 0.0
    %978 = vmatpush2.msra.mxu0 0.0
    %979 = vmatprep.subr.mxu0 0.0
    %980 = vmatpush2.msra.mxu0 0.0
    %981 = vmatprep.subr.mxu0 0.0
    %982 = vmatpush2.msra.mxu0 0.0
    %983 = vmatprep.subr.mxu0 0.0
    %984 = vmatpush2.msra.mxu0 0.0
    %985 = vmatprep.subr.mxu0 0.0
    %986 = vmatpush2.msra.mxu0 0.0
    %987 = vmatprep.subr.mxu0 0.0
    %988 = vmatpush2.msra.mxu0 0.0
    %989 = vmatprep.subr.mxu0 0.0
    %990 = vmatpush2.msra.mxu0 0.0
    %991 = vmatprep.subr.mxu0 0.0
    %992 = vmatpush2.msra.mxu0 0.0
    %993 = vmatprep.subr.mxu0 0.0
    %994 = vmatpush2.msra.mxu0 0.0
    %995 = vmatprep.subr.mxu0 0.0
    %996 = vmatpush2.msra.mxu0 0.0
    %997 = vmatprep.subr.mxu0 0.0
    %998 = vmatpush2.msra.mxu0 0.0
    %999 = vmatprep.subr.mxu0 0.0
    %1000 = vmatpush2.msra.mxu0 0.0
    %1001 = vmatprep.subr.mxu0 0.0
    %1002 = vmatpush2.msra.mxu0 0.0
    %1003 = vmatprep.mubr.f32.mxu0 0.0
    %1004 = vmatmul.mubr.f32.gmra.mxu0 %v937
    %v1005 = vpop.f32.mrf.mxu0
    %v1006 = vadd.f32 0.0, %v1005
    %v1007 = vpop.f32.mrf.mxu0
    %1008 = vdwg.mxu0
    %v1009 = vadd.f32 %v933, %v1006
    %v1010 = vmul.f32 %v1009, 0.5
    %v1011 = vtanh.pop %v1010
    %v1012 = vadd.f32 %v1011, 1.0
    %v1013 = vmul.f32 %v1012, 0.5
    %v1014 = vtanh.pop %v1009
    %v1015 = vsel %vm233, %v1014, %v1013
    %v1016 = vmul.f32 %v1015, %v926
    %1018 = vrot.lane.b32.xlu0 %v1015, 64
    %v1019 = vpop.permute.xlu0 %1018
    %v1021 = vmul.f32 %v1015, %v1019
    %1023 = vrot.lane.b32.xlu0 %v1021, 32
    %v1024 = vpop.permute.xlu0 %1023
    %v1026 = vadd.f32 %v1016, %v1024
    %v1027 = vtanh.pop %v1026
    %1029 = vrot.lane.b32.xlu0 %v1027, 64
    %v1030 = vpop.permute.xlu0 %1029
    %v1032 = vmul.f32 %v1015, %v1030
    %v1033 = vrot.slane %v432, 6
    %v1035 = vrot.slane %v532, 4
    %v1037 = vrot.slane %v632, 2
    %v1039 = vrot.slane %v832, 6
    %v1041 = vrot.slane %v932, 4
    %v1044 = vrot.slane %v1032, 2
    %vm1046 = vcmask 1041408
    %v1047 = vsel %vm1046, %v332, %v1033
    %vm1048 = vcmask 1043456
    %v1049 = vsel %vm1048, %v1047, %v1035
    %vm1050 = vcmask 1045504
    %v1051 = vsel %vm1050, %v1049, %v1037
    %v1052 = vsel %vm1046, %v732, %v1039
    %v1053 = vsel %vm1048, %v1052, %v1041
    %v1054 = vsel %vm1050, %v1053, %v1044
    %v1055 = vld [vmem:[%s1] sm:$0xff]
    %v1056 = vld [vmem:[%s1 + $0x8] sm:$0xff]
    %1058 = vset.pattern.permute.xlu0 0
    %1059 = vperm.xlu0 %1058, %v1055
    %v1060 = vpop.permute.xlu0 %1059
    %1063 = vset.pattern.permute.xlu0 0
    %1064 = vperm.xlu0 %1063, %v1056
    %v1065 = vpop.permute.xlu0 %1064
    %v1067 = vmul.f32 %v1051, %v1060
    %v1068 = vmul.f32 %v1054, %v1065
    %v1069 = vld [vmem:[%s6] sm:$0xff]
    %v1070 = vld [vmem:[%s6 + $0x8] sm:$0xff]
    %v1071 = vld [vmem:[%s6 + $0x10] sm:$0xff]
    %v1072 = vld [vmem:[%s6 + $0x18] sm:$0xff]
    %v1073 = vld [vmem:[%s7] sm:$0x1]
    %v1075 = vlaneseq
    %v1076 = vshrl.u32 %v1075, 7
    %v1077 = vsub.s32 0, %v1076
    %v1078 = vrot.slane %v1073, %v1077
    %1082 = vrot.lane.b32.xlu0 %v1067, 32
    %v1083 = vpop.permute.xlu0 %1082
    %1084 = vrot.lane.b32.xlu0 %v1068, 32
    %v1085 = vpop.permute.xlu0 %1084
    %v1086 = vsel %vm235, %v1083, 0
    %v1088 = vsel %vm235, %v1085, 0
    %1090 = vmatprep.subr.mxu0 0.0
    %1091 = vmatpush1.msra.mxu0 0.0
    %1092 = vmatprep.subr.mxu0 0.0
    %1093 = vmatpush1.msra.mxu0 0.0
    %1094 = vmatprep.subr.mxu0 0.0
    %1095 = vmatpush1.msra.mxu0 0.0
    %1096 = vmatprep.subr.mxu0 0.0
    %1097 = vmatpush1.msra.mxu0 0.0
    %1098 = vmatprep.subr.mxu0 0.0
    %1099 = vmatpush1.msra.mxu0 0.0
    %1100 = vmatprep.subr.mxu0 0.0
    %1101 = vmatpush1.msra.mxu0 0.0
    %1102 = vmatprep.subr.mxu0 0.0
    %1103 = vmatpush1.msra.mxu0 0.0
    %1104 = vmatprep.subr.mxu0 0.0
    %1105 = vmatpush1.msra.mxu0 0.0
    %1106 = vmatprep.subr.mxu0 0.0
    %1107 = vmatpush1.msra.mxu0 0.0
    %1108 = vmatprep.subr.mxu0 0.0
    %1109 = vmatpush1.msra.mxu0 0.0
    %1110 = vmatprep.subr.mxu0 0.0
    %1111 = vmatpush1.msra.mxu0 0.0
    %1112 = vmatprep.subr.mxu0 0.0
    %1113 = vmatpush1.msra.mxu0 0.0
    %1114 = vmatprep.subr.mxu0 0.0
    %1115 = vmatpush1.msra.mxu0 %v1072
    %1116 = vmatprep.subr.mxu0 0.0
    %1117 = vmatpush1.msra.mxu0 %v1071
    %1118 = vmatprep.subr.mxu0 0.0
    %1119 = vmatpush1.msra.mxu0 %v1070
    %1120 = vmatprep.subr.mxu0 0.0
    %1121 = vmatpush1.msra.mxu0 %v1069
    %1122 = vmatprep.subr.mxu0 0.0
    %1123 = vmatpush2.msra.mxu0 0.0
    %1124 = vmatprep.subr.mxu0 0.0
    %1125 = vmatpush2.msra.mxu0 0.0
    %1126 = vmatprep.subr.mxu0 0.0
    %1127 = vmatpush2.msra.mxu0 0.0
    %1128 = vmatprep.subr.mxu0 0.0
    %1129 = vmatpush2.msra.mxu0 0.0
    %1130 = vmatprep.subr.mxu0 0.0
    %1131 = vmatpush2.msra.mxu0 0.0
    %1132 = vmatprep.subr.mxu0 0.0
    %1133 = vmatpush2.msra.mxu0 0.0
    %1134 = vmatprep.subr.mxu0 0.0
    %1135 = vmatpush2.msra.mxu0 0.0
    %1136 = vmatprep.subr.mxu0 0.0
    %1137 = vmatpush2.msra.mxu0 0.0
    %1138 = vmatprep.subr.mxu0 0.0
    %1139 = vmatpush2.msra.mxu0 0.0
    %1140 = vmatprep.subr.mxu0 0.0
    %1141 = vmatpush2.msra.mxu0 0.0
    %1142 = vmatprep.subr.mxu0 0.0
    %1143 = vmatpush2.msra.mxu0 0.0
    %1144 = vmatprep.subr.mxu0 0.0
    %1145 = vmatpush2.msra.mxu0 0.0
    %1146 = vmatprep.subr.mxu0 0.0
    %1147 = vmatpush2.msra.mxu0 0.0
    %1148 = vmatprep.subr.mxu0 0.0
    %1149 = vmatpush2.msra.mxu0 0.0
    %1150 = vmatprep.subr.mxu0 0.0
    %1151 = vmatpush2.msra.mxu0 0.0
    %1152 = vmatprep.subr.mxu0 0.0
    %1153 = vmatpush2.msra.mxu0 0.0
    %1154 = vmatprep.mubr.f32.mxu0 0.0
    %1155 = vmatmul.mubr.f32.gmra.mxu0 %v1086
    %v1156 = vpop.f32.mrf.mxu0
    %v1157 = vadd.f32 %v1078, %v1156
    %v1158 = vpop.f32.mrf.mxu0
    %1159 = vmatprep.mubr.f32.mxu0 0.0
    %1160 = vmatmul.mubr.f32.gmra.mxu0 %v1088
    %v1161 = vpop.f32.mrf.mxu0
    %v1162 = vadd.f32 %v1078, %v1161
    %v1163 = vpop.f32.mrf.mxu0
    %1164 = vdwg.mxu0
    %v1165 = vld [vmem:[#allocation12] sm:$0x1]
    %v1167 = vlaneseq
    %v1168 = vshrl.u32 %v1167, 7
    %v1169 = vsub.s32 0, %v1168
    %v1170 = vrot.slane %v1165, %v1169
    %v1172 = vmul.f32 %v1157, %v1170
    %v1173 = vmul.f32 %v1162, %v1170
    %v1174 = vsel %vm235, %v1172, 0.0
    %1175 = vadd.xlane.f32.xlu0 %v1174
    %v1176 = vpop.xlane.xlu0 %1175
    %v1177 = vsel %vm235, %v1173, 0.0
    %1178 = vadd.xlane.f32.xlu0 %v1177
    %v1179 = vpop.xlane.xlu0 %1178
    %v1180 = vld [vmem:[#allocation7] sm:$0x3]
    %v1181 = vld [vmem:[#allocation13] sm:$0x1]
    %v1183 = vlaneseq
    %v1184 = vshrl.u32 %v1183, 7
    %v1185 = vsub.s32 0, %v1184
    %v1186 = vrot.slane %v1181, %v1185
    %v1188 = vmul.f32 %v1180, %v1186
    %vm1189 = vcmask 254976
    %v1190 = vsel %vm1189, %v1188, 0.0
    %1191 = vadd.xlane.f32.xlu0 %v1190
    %v1192 = vpop.xlane.xlu0 %1191
    %v1193 = vld [vmem:[#allocation3] sm:$0x1]
    %v1195 = vlaneseq
    %v1196 = vshrl.u32 %v1195, 7
    %v1197 = vsub.s32 0, %v1196
    %v1198 = vrot.slane %v1193, %v1197
    %v1200 = vadd.f32 %v1192, %v1198
    %v1202 = vrot.slane %v1200, 6
    %v1204 = vrot.slane %v1200, 4
    %v1206 = vrot.slane %v1200, 2
    %v1208 = vsel %vm1046, %v1200, %v1202
    %v1209 = vsel %vm1048, %v1208, %v1204
    %v1210 = vsel %vm1050, %v1209, %v1206
    %v1211 = vadd.f32 %v1176, %v1210
    %v1212 = vadd.f32 %v1179, %v1210
    %v1213 = vtanh.pop %v1211
    %v1214 = vtanh.pop %v1212
    %v1215 = vmul.f32 %v1213, 1.442695
    %v1216 = vpow.pop %v1215
    %v1217 = vmul.f32 %v1214, 1.442695
    %v1218 = vpow.pop %v1217
    %v1219 = vld [vmem:[%s11] sm:$0x3]
    %1221 = vset.pattern.permute.xlu0 0
    %1222 = vperm.xlu0 %1221, %v1216
    %v1223 = vpop.permute.xlu0 %1222
    %1226 = vset.pattern.permute.xlu0 0
    %1227 = vperm.xlu0 %1226, %v1218
    %v1228 = vpop.permute.xlu0 %1227
    %v1230 = vmul.f32 %v1223, %v1157
    %v1231 = vmul.f32 %v1228, %v1162
    %vm1232 = vcmask 130048
    %v1234 = vsel %vm1232, %v1219, 0
    %1236 = vmatprep.subr.mxu0 0.0
    %1237 = vmatpush1.msra.mxu0 0.0
    %1238 = vmatprep.subr.mxu0 0.0
    %1239 = vmatpush1.msra.mxu0 0.0
    %1240 = vmatprep.subr.mxu0 0.0
    %1241 = vmatpush1.msra.mxu0 0.0
    %1242 = vmatprep.subr.mxu0 0.0
    %1243 = vmatpush1.msra.mxu0 0.0
    %1244 = vmatprep.subr.mxu0 0.0
    %1245 = vmatpush1.msra.mxu0 0.0
    %1246 = vmatprep.subr.mxu0 0.0
    %1247 = vmatpush1.msra.mxu0 0.0
    %1248 = vmatprep.subr.mxu0 0.0
    %1249 = vmatpush1.msra.mxu0 0.0
    %1250 = vmatprep.subr.mxu0 0.0
    %1251 = vmatpush1.msra.mxu0 0.0
    %1252 = vmatprep.subr.mxu0 0.0
    %1253 = vmatpush1.msra.mxu0 0.0
    %1254 = vmatprep.subr.mxu0 0.0
    %1255 = vmatpush1.msra.mxu0 0.0
    %1256 = vmatprep.subr.mxu0 0.0
    %1257 = vmatpush1.msra.mxu0 0.0
    %1258 = vmatprep.subr.mxu0 0.0
    %1259 = vmatpush1.msra.mxu0 0.0
    %1260 = vmatprep.subr.mxu0 0.0
    %1261 = vmatpush1.msra.mxu0 0.0
    %1262 = vmatprep.subr.mxu0 0.0
    %1263 = vmatpush1.msra.mxu0 0.0
    %1264 = vmatprep.subr.mxu0 0.0
    %1265 = vmatpush1.msra.mxu0 %v1231
    %1266 = vmatprep.subr.mxu0 0.0
    %1267 = vmatpush1.msra.mxu0 %v1230
    %1268 = vmatprep.subr.mxu0 0.0
    %1269 = vmatpush2.msra.mxu0 0.0
    %1270 = vmatprep.subr.mxu0 0.0
    %1271 = vmatpush2.msra.mxu0 0.0
    %1272 = vmatprep.subr.mxu0 0.0
    %1273 = vmatpush2.msra.mxu0 0.0
    %1274 = vmatprep.subr.mxu0 0.0
    %1275 = vmatpush2.msra.mxu0 0.0
    %1276 = vmatprep.subr.mxu0 0.0
    %1277 = vmatpush2.msra.mxu0 0.0
    %1278 = vmatprep.subr.mxu0 0.0
    %1279 = vmatpush2.msra.mxu0 0.0
    %1280 = vmatprep.subr.mxu0 0.0
    %1281 = vmatpush2.msra.mxu0 0.0
    %1282 = vmatprep.subr.mxu0 0.0
    %1283 = vmatpush2.msra.mxu0 0.0
    %1284 = vmatprep.subr.mxu0 0.0
    %1285 = vmatpush2.msra.mxu0 0.0
    %1286 = vmatprep.subr.mxu0 0.0
    %1287 = vmatpush2.msra.mxu0 0.0
    %1288 = vmatprep.subr.mxu0 0.0
    %1289 = vmatpush2.msra.mxu0 0.0
    %1290 = vmatprep.subr.mxu0 0.0
    %1291 = vmatpush2.msra.mxu0 0.0
    %1292 = vmatprep.subr.mxu0 0.0
    %1293 = vmatpush2.msra.mxu0 0.0
    %1294 = vmatprep.subr.mxu0 0.0
    %1295 = vmatpush2.msra.mxu0 0.0
    %1296 = vmatprep.subr.mxu0 0.0
    %1297 = vmatpush2.msra.mxu0 0.0
    %1298 = vmatprep.subr.mxu0 0.0
    %1299 = vmatpush2.msra.mxu0 0.0
    %1300 = vmatprep.mubr.f32.mxu0 0.0
    %1301 = vmatmul.mubr.f32.gmra.mxu0 %v1234
    %v1302 = vpop.f32.mrf.mxu0
    %v1303 = vadd.f32 0.0, %v1302
    %v1304 = vpop.f32.mrf.mxu0
    %1305 = vdwg.mxu0
    %1306 = vmatprep.subr.mxu0 0.0
    %1307 = vmatpush1.msra.mxu0 0.0
    %1308 = vmatprep.subr.mxu0 0.0
    %1309 = vmatpush1.msra.mxu0 0.0
    %1310 = vmatprep.subr.mxu0 0.0
    %1311 = vmatpush1.msra.mxu0 0.0
    %1312 = vmatprep.subr.mxu0 0.0
    %1313 = vmatpush1.msra.mxu0 0.0
    %1314 = vmatprep.subr.mxu0 0.0
    %1315 = vmatpush1.msra.mxu0 0.0
    %1316 = vmatprep.subr.mxu0 0.0
    %1317 = vmatpush1.msra.mxu0 0.0
    %1318 = vmatprep.subr.mxu0 0.0
    %1319 = vmatpush1.msra.mxu0 0.0
    %1320 = vmatprep.subr.mxu0 0.0
    %1321 = vmatpush1.msra.mxu0 0.0
    %1322 = vmatprep.subr.mxu0 0.0
    %1323 = vmatpush1.msra.mxu0 0.0
    %1324 = vmatprep.subr.mxu0 0.0
    %1325 = vmatpush1.msra.mxu0 0.0
    %1326 = vmatprep.subr.mxu0 0.0
    %1327 = vmatpush1.msra.mxu0 0.0
    %1328 = vmatprep.subr.mxu0 0.0
    %1329 = vmatpush1.msra.mxu0 0.0
    %1330 = vmatprep.subr.mxu0 0.0
    %1331 = vmatpush1.msra.mxu0 0.0
    %1332 = vmatprep.subr.mxu0 0.0
    %1333 = vmatpush1.msra.mxu0 0.0
    %1334 = vmatprep.subr.mxu0 0.0
    %1335 = vmatpush1.msra.mxu0 %v1218
    %1336 = vmatprep.subr.mxu0 0.0
    %1337 = vmatpush1.msra.mxu0 %v1216
    %1338 = vmatprep.subr.mxu0 0.0
    %1339 = vmatpush2.msra.mxu0 0.0
    %1340 = vmatprep.subr.mxu0 0.0
    %1341 = vmatpush2.msra.mxu0 0.0
    %1342 = vmatprep.subr.mxu0 0.0
    %1343 = vmatpush2.msra.mxu0 0.0
    %1344 = vmatprep.subr.mxu0 0.0
    %1345 = vmatpush2.msra.mxu0 0.0
    %1346 = vmatprep.subr.mxu0 0.0
    %1347 = vmatpush2.msra.mxu0 0.0
    %1348 = vmatprep.subr.mxu0 0.0
    %1349 = vmatpush2.msra.mxu0 0.0
    %1350 = vmatprep.subr.mxu0 0.0
    %1351 = vmatpush2.msra.mxu0 0.0
    %1352 = vmatprep.subr.mxu0 0.0
    %1353 = vmatpush2.msra.mxu0 0.0
    %1354 = vmatprep.subr.mxu0 0.0
    %1355 = vmatpush2.msra.mxu0 0.0
    %1356 = vmatprep.subr.mxu0 0.0
    %1357 = vmatpush2.msra.mxu0 0.0
    %1358 = vmatprep.subr.mxu0 0.0
    %1359 = vmatpush2.msra.mxu0 0.0
    %1360 = vmatprep.subr.mxu0 0.0
    %1361 = vmatpush2.msra.mxu0 0.0
    %1362 = vmatprep.subr.mxu0 0.0
    %1363 = vmatpush2.msra.mxu0 0.0
    %1364 = vmatprep.subr.mxu0 0.0
    %1365 = vmatpush2.msra.mxu0 0.0
    %1366 = vmatprep.subr.mxu0 0.0
    %1367 = vmatpush2.msra.mxu0 0.0
    %1368 = vmatprep.subr.mxu0 0.0
    %1369 = vmatpush2.msra.mxu0 0.0
    %1370 = vmatprep.mubr.f32.mxu0 0.0
    %1371 = vmatmul.mubr.f32.gmra.mxu0 %v1234
    %v1372 = vpop.f32.mrf.mxu0
    %v1373 = vadd.f32 0.0, %v1372
    %v1374 = vpop.f32.mrf.mxu0
    %1375 = vdwg.mxu0
    %v1376 = vrcp.pop %v1373
    %1378 = vset.pattern.permute.xlu0 0
    %1379 = vperm.xlu0 %1378, %v1376
    %v1380 = vpop.permute.xlu0 %1379
    %v1382 = vmul.f32 %v1303, %v1380
    %v1383 = vld [vmem:[%s12] sm:$0xff]
    %v1384 = vld [vmem:[%s12 + $0x8] sm:$0xff]
    %v1385 = vld [vmem:[%s12 + $0x10] sm:$0xff]
    %v1386 = vld [vmem:[%s12 + $0x18] sm:$0xff]
    %v1387 = vld [vmem:[%s13] sm:$0x1]
    %v1389 = vlaneseq
    %v1390 = vshrl.u32 %v1389, 7
    %v1391 = vsub.s32 0, %v1390
    %v1392 = vrot.slane %v1387, %v1391
    %v1395 = vsel %vm235, %v1382, 0
    %1397 = vmatprep.subr.mxu0 0.0
    %1398 = vmatpush1.msra.mxu0 0.0
    %1399 = vmatprep.subr.mxu0 0.0
    %1400 = vmatpush1.msra.mxu0 0.0
    %1401 = vmatprep.subr.mxu0 0.0
    %1402 = vmatpush1.msra.mxu0 0.0
    %1403 = vmatprep.subr.mxu0 0.0
    %1404 = vmatpush1.msra.mxu0 0.0
    %1405 = vmatprep.subr.mxu0 0.0
    %1406 = vmatpush1.msra.mxu0 0.0
    %1407 = vmatprep.subr.mxu0 0.0
    %1408 = vmatpush1.msra.mxu0 0.0
    %1409 = vmatprep.subr.mxu0 0.0
    %1410 = vmatpush1.msra.mxu0 0.0
    %1411 = vmatprep.subr.mxu0 0.0
    %1412 = vmatpush1.msra.mxu0 0.0
    %1413 = vmatprep.subr.mxu0 0.0
    %1414 = vmatpush1.msra.mxu0 0.0
    %1415 = vmatprep.subr.mxu0 0.0
    %1416 = vmatpush1.msra.mxu0 0.0
    %1417 = vmatprep.subr.mxu0 0.0
    %1418 = vmatpush1.msra.mxu0 0.0
    %1419 = vmatprep.subr.mxu0 0.0
    %1420 = vmatpush1.msra.mxu0 0.0
    %1421 = vmatprep.subr.mxu0 0.0
    %1422 = vmatpush1.msra.mxu0 %v1386
    %1423 = vmatprep.subr.mxu0 0.0
    %1424 = vmatpush1.msra.mxu0 %v1385
    %1425 = vmatprep.subr.mxu0 0.0
    %1426 = vmatpush1.msra.mxu0 %v1384
    %1427 = vmatprep.subr.mxu0 0.0
    %1428 = vmatpush1.msra.mxu0 %v1383
    %1429 = vmatprep.subr.mxu0 0.0
    %1430 = vmatpush2.msra.mxu0 0.0
    %1431 = vmatprep.subr.mxu0 0.0
    %1432 = vmatpush2.msra.mxu0 0.0
    %1433 = vmatprep.subr.mxu0 0.0
    %1434 = vmatpush2.msra.mxu0 0.0
    %1435 = vmatprep.subr.mxu0 0.0
    %1436 = vmatpush2.msra.mxu0 0.0
    %1437 = vmatprep.subr.mxu0 0.0
    %1438 = vmatpush2.msra.mxu0 0.0
    %1439 = vmatprep.subr.mxu0 0.0
    %1440 = vmatpush2.msra.mxu0 0.0
    %1441 = vmatprep.subr.mxu0 0.0
    %1442 = vmatpush2.msra.mxu0 0.0
    %1443 = vmatprep.subr.mxu0 0.0
    %1444 = vmatpush2.msra.mxu0 0.0
    %1445 = vmatprep.subr.mxu0 0.0
    %1446 = vmatpush2.msra.mxu0 0.0
    %1447 = vmatprep.subr.mxu0 0.0
    %1448 = vmatpush2.msra.mxu0 0.0
    %1449 = vmatprep.subr.mxu0 0.0
    %1450 = vmatpush2.msra.mxu0 0.0
    %1451 = vmatprep.subr.mxu0 0.0
    %1452 = vmatpush2.msra.mxu0 0.0
    %1453 = vmatprep.subr.mxu0 0.0
    %1454 = vmatpush2.msra.mxu0 0.0
    %1455 = vmatprep.subr.mxu0 0.0
    %1456 = vmatpush2.msra.mxu0 0.0
    %1457 = vmatprep.subr.mxu0 0.0
    %1458 = vmatpush2.msra.mxu0 0.0
    %1459 = vmatprep.subr.mxu0 0.0
    %1460 = vmatpush2.msra.mxu0 0.0
    %1461 = vmatprep.mubr.f32.mxu0 0.0
    %1462 = vmatmul.mubr.f32.gmra.mxu0 %v1395
    %v1463 = vpop.f32.mrf.mxu0
    %v1464 = vadd.f32 %v1392, %v1463
    %v1465 = vpop.f32.mrf.mxu0
    %1466 = vdwg.mxu0
    %vm1467 = vcmask 17408
    %1468 = vst.msk [vmem:[#allocation15] sm:$0x3] %vm1467, %v1464
    // Predicated region
    $region82: #{tpu_custom_call.1} parent=1 // pred_check
      _
    $region83: #{tpu_custom_call.1} parent=1 // pred_check_branch
      %1470 = sbr.rel (0) target = $region85
    $region84: #{tpu_custom_call.1} parent=1 // pred_region
      %s1472 = ssub.s32 32, 32
      %1473 = vsyncadd [#allocation6], %s1472
      %s1475 = sshll.u32 [#allocation15], 4
      %s1476 = int_to_ptr.vmem [resolvable:$true] %s1475
      %1478 = dma.vmem_to_hbm [thread:$0]  %s1476, 32, %s14, [#allocation6]
    $region85: #{tpu_custom_call.1} parent=1 // pred_fallthru
      _
    // Predicated region
    $region86: #{tpu_custom_call.1} parent=1 // pred_check
      _
    $region87: #{tpu_custom_call.1} parent=1 // pred_check_branch
      %1480 = sbr.rel (0) target = $region89
    $region88: #{tpu_custom_call.1} parent=1 // pred_region
      %1481 = dma.done [#allocation6], 32
    $region89: #{tpu_custom_call.1} parent=1 // pred_fallthru
      _
    %1482 = vsyncpa [#allocation5], 1
    %1483 = vsyncpa [#allocation8], 1
    %1484 = vsyncpa [#allocation11], 1
    %1485 = vsyncpa [#allocation14], 1
    %1486 = vsyncpa [#allocation6], 1

</llo_original>
